<compile_context>
chip_gen: v7x
topology: tpu7x:2x2x1
jax: 0.10.0
libtpu: 0.0.40
codegen_flags: <defaults>
</compile_context>

<pallas_src>
import functools
import math

import jax
import jax.numpy as jnp
from jax.experimental import pallas as pl
from jax.experimental.pallas import tpu as pltpu


# ---------------------------------------------------------------------------
# Kernel
# ---------------------------------------------------------------------------
def mha_kernel(q_ref, k_ref, v_ref,
               wqt_ref, wkt_ref, wvt_ref,
               bq_ref, bk_ref, bv_ref,
               wot_ref, bo_ref,
               out_ref, *rest,
               num_heads, head_dim, head_group, need_weights):
    """One (batch, L-tile) grid step.

    q_ref: (1, TL, E)   k_ref/v_ref: (1, S, E)
    wqt/wkt/wvt/wot: (E, E) bf16, pre-transposed (scale folded into wqt)
    bq/bk/bv/bo: (1, E) f32 (scale folded into bq)
    out_ref: (1, TL, E)   [w_ref: (1, TL, S) if need_weights]
    scratch: qh_sc (H, TL, hd) bf16, kh_sc/vh_sc (H, S, hd) bf16, ctx_sc (TL, E) bf16
    """
    if need_weights:
        w_ref, qh_sc, kh_sc, vh_sc, ctx_sc = rest
    else:
        w_ref = None
        qh_sc, kh_sc, vh_sc, ctx_sc = rest

    H, hd, G = num_heads, head_dim, head_group
    l_idx = pl.program_id(1)

    # ---- K/V projection: once per batch element (L-tile 0), cached head-major in VMEM.
    # Valid because the L axis is the innermost "arbitrary" grid axis (l==0 runs first
    # for every batch element on whichever core owns it).
    @pl.when(l_idx == 0)
    def _():
        kin = k_ref[0].astype(jnp.bfloat16)
        vin = v_ref[0].astype(jnp.bfloat16)
        K = jnp.dot(kin, wkt_ref[...], preferred_element_type=jnp.float32) + bk_ref[...]
        V = jnp.dot(vin, wvt_ref[...], preferred_element_type=jnp.float32) + bv_ref[...]
        Kb = K.astype(jnp.bfloat16)
        Vb = V.astype(jnp.bfloat16)
        for h in range(H):                       # static lane-slice copies, amortized over L
            lo = h * hd
            kh_sc[h] = Kb[:, lo:lo + hd]
            vh_sc[h] = Vb[:, lo:lo + hd]

    # ---- Q projection for this L tile (scale already folded into wqt / bq) ----
    qin = q_ref[0].astype(jnp.bfloat16)
    Q = jnp.dot(qin, wqt_ref[...], preferred_element_type=jnp.float32) + bq_ref[...]
    Qb = Q.astype(jnp.bfloat16)
    for h in range(H):
        lo = h * hd
        qh_sc[h] = Qb[:, lo:lo + hd]

    # ---- head-batched attention core, optionally split in head groups of size G ----
    w_acc = None
    for g0 in range(0, H, G):
        qg = qh_sc[g0:g0 + G]                    # (G, TL, hd) bf16
        kg = kh_sc[g0:g0 + G]                    # (G, S,  hd) bf16
        vg = vh_sc[g0:g0 + G]                    # (G, S,  hd) bf16

        scores = jnp.einsum("hld,hsd->hls", qg, kg,
                            preferred_element_type=jnp.float32)          # (G, TL, S) f32
        m = scores.max(axis=-1, keepdims=True)

        if need_weights:
            # Exact softmax (rows of the returned weights sum to 1).
            p = jnp.exp(scores - m)                                       # f32
            l = p.sum(axis=-1, keepdims=True)
            attn = p / l
            ctx = jnp.einsum("hls,hsd->hld", attn.astype(jnp.bfloat16), vg,
                             preferred_element_type=jnp.float32)          # (G, TL, hd)
            wsum = attn.sum(axis=0)                                       # (TL, S)
            w_acc = wsum if w_acc is None else w_acc + wsum
        else:
            # Fast path: bf16 exp on the EUP, normalize the (small) context instead of p.
            p = jnp.exp((scores - m).astype(jnp.bfloat16))                # (G, TL, S) bf16
            l = jnp.sum(p.astype(jnp.float32), axis=-1, keepdims=True)    # (G, TL, 1) f32
            ctx = jnp.einsum("hls,hsd->hld", p, vg,
                             preferred_element_type=jnp.float32)          # (G, TL, hd)
            ctx = ctx * pl.reciprocal(l, approx=True)

        for i in range(G):
            lo = (g0 + i) * hd
            ctx_sc[:, lo:lo + hd] = ctx[i].astype(jnp.bfloat16)

    # ---- fused output projection (bf16 x bf16 -> f32) ----
    out = jnp.dot(ctx_sc[...], wot_ref[...],
                  preferred_element_type=jnp.float32) + bo_ref[...]       # (TL, E)
    out_ref[0] = out.astype(out_ref.dtype)

    if need_weights:
        # attn_output_weights averaged over heads (PyTorch: sum / num_heads).
        w_ref[0] = (w_acc * (1.0 / H)).astype(w_ref.dtype)


# ---------------------------------------------------------------------------
# VMEM planning (generation-aware)
# ---------------------------------------------------------------------------
def _vmem_budget_bytes():
    try:
        cap = int(pltpu.get_tpu_info().vmem_capacity_bytes)
    except Exception:
        return 64 * 1024 * 1024                      # conservative: fits every generation
    return max(int(cap * 0.75), 32 * 1024 * 1024)    # ~96 MiB on v5e/v6e, ~48 MiB on v7x


def _footprint(bl, G, *, S, E, H, hd, in_b, out_b, need_weights):
    bf16, f32 = 2, 4
    fixed = (2 * 2 * S * E * in_b          # k, v input blocks (double-buffered)
             + 2 * 4 * E * E * bf16        # projection weights (bf16, double-buffered)
             + 2 * 4 * E * f32             # biases
             + 2 * H * S * hd * bf16)      # K/V head-major caches
    per_tile = (2 * bl * E * in_b          # q block
                + 2 * bl * E * out_b       # output block
                + H * bl * hd * bf16       # Q head-major cache
                + bl * E * bf16            # merged-context slab
                + bl * E * f32)            # Q projection f32 intermediate
    if need_weights:
        per_tile += 2 * bl * S * out_b                       # weights output block
        core = G * bl * S * (3 * f32) + bl * S * f32         # scores, p, attn (f32) + head sum
    else:
        core = G * bl * S * (f32 + bf16)                     # scores f32 + p bf16
    return fixed + per_tile + core + (2 << 20)               # + Mosaic internal headroom


def _plan(L, S, E, H, hd, need_weights, in_b, out_b, block_l_req):
    budget = _vmem_budget_bytes()
    fp = functools.partial(_footprint, S=S, E=E, H=H, hd=hd,
                           in_b=in_b, out_b=out_b, need_weights=need_weights)
    cands = sorted({c for c in (2048, 1024, 512, 256, 128, 64, 32, 16, 8)
                    if c <= L and L % c == 0} | {L}, reverse=True)
    if (block_l_req is not None and L % block_l_req == 0
            and (block_l_req % 8 == 0 or block_l_req == L)):
        cands = [block_l_req]
    for bl in cands:
        if fp(bl, H) <= budget:
            return bl, H, budget
    bl = cands[-1]
    for G in range(H, 0, -1):
        if H % G == 0 and fp(bl, G) <= budget:
            return bl, G, budget
    # TODO(synk): if even G=1 overflows, S tiling (online softmax) would be required.
    return bl, 1, budget


# ---------------------------------------------------------------------------
# Wrappers
# ---------------------------------------------------------------------------
def multihead_attention_pallas_batch_major(q_nle, k_nse, v_nse, params, num_heads,
                                           need_weights=True, block_l=None):
    """Batch-major entry point. q_nle: (N, L, E); k/v: (N, S, E).

    Returns (attn_output (N, L, E), attn_output_weights (N, L, S) or None)."""
    N, L, E = q_nle.shape
    S = k_nse.shape[1]
    assert E % num_heads == 0
    head_dim = E // num_heads
    scale = float(head_dim) ** -0.5
    out_dtype = q_nle.dtype
    in_b = jnp.dtype(q_nle.dtype).itemsize
    out_b = jnp.dtype(out_dtype).itemsize

    block_l, head_group, vmem_limit = _plan(L, S, E, num_heads, head_dim,
                                            need_weights, in_b, out_b, block_l)
    num_l_tiles = L // block_l

    # Pre-transposed bf16 weights: x @ W.T == x @ Wt; softmax scale folded into Wq / bq.
    wq_t = (params["wq"].T * scale).astype(jnp.bfloat16)
    wk_t = params["wk"].T.astype(jnp.bfloat16)
    wv_t = params["wv"].T.astype(jnp.bfloat16)
    wo_t = params["wo"].T.astype(jnp.bfloat16)
    bq = (params["bq"] * scale).reshape(1, E).astype(jnp.float32)
    bk = params["bk"].reshape(1, E).astype(jnp.float32)
    bv = params["bv"].reshape(1, E).astype(jnp.float32)
    bo = params["bo"].reshape(1, E).astype(jnp.float32)

    kernel = functools.partial(
        mha_kernel, num_heads=num_heads, head_dim=head_dim,
        head_group=head_group, need_weights=need_weights)

    const2d = lambda arr: pl.BlockSpec(arr.shape, lambda n, l: (0, 0))

    out_shapes = [jax.ShapeDtypeStruct((N, L, E), out_dtype)]
    out_specs = [pl.BlockSpec((1, block_l, E), lambda n, l: (n, l, 0))]
    if need_weights:
        out_shapes.append(jax.ShapeDtypeStruct((N, L, S), out_dtype))
        out_specs.append(pl.BlockSpec((1, block_l, S), lambda n, l: (n, l, 0)))

    res = pl.pallas_call(
        kernel,
        out_shape=tuple(out_shapes),
        grid_spec=pltpu.PrefetchScalarGridSpec(
            num_scalar_prefetch=0,
            grid=(N, num_l_tiles),
            in_specs=[
                pl.BlockSpec((1, block_l, E), lambda n, l: (n, l, 0)),   # q (per L tile)
                pl.BlockSpec((1, S, E), lambda n, l: (n, 0, 0)),         # k (per batch)
                pl.BlockSpec((1, S, E), lambda n, l: (n, 0, 0)),         # v (per batch)
                const2d(wq_t), const2d(wk_t), const2d(wv_t),             # projection weights
                const2d(bq), const2d(bk), const2d(bv),                   # projection biases
                const2d(wo_t), const2d(bo),                              # output projection
            ],
            out_specs=out_specs,
            scratch_shapes=[
                pltpu.VMEM((num_heads, block_l, head_dim), jnp.bfloat16),   # Q, head-major
                pltpu.VMEM((num_heads, S, head_dim), jnp.bfloat16),         # K cache
                pltpu.VMEM((num_heads, S, head_dim), jnp.bfloat16),         # V cache
                pltpu.VMEM((block_l, E), jnp.bfloat16),                     # merged context
            ]),
        compiler_params=pltpu.CompilerParams(
            dimension_semantics=("parallel", "arbitrary"),
            vmem_limit_bytes=vmem_limit),
    )(q_nle, k_nse, v_nse, wq_t, wk_t, wv_t, bq, bk, bv, wo_t, bo)

    out_nle = res[0]
    w_nls = res[1] if need_weights else None
    return out_nle, w_nls


def multihead_attention_pallas(query, key, value, params, num_heads,
                               need_weights=True, block_l=None):
    """PyTorch layout: query (L, N, E); key, value (S, N, E).

    Returns (attn_output (L, N, E), attn_output_weights (N, L, S) or None)."""
    q_nle = jnp.transpose(query, (1, 0, 2))
    k_nse = jnp.transpose(key, (1, 0, 2))
    v_nse = jnp.transpose(value, (1, 0, 2))
    out_nle, w_nls = multihead_attention_pallas_batch_major(
        q_nle, k_nse, v_nse, params, num_heads, need_weights=need_weights, block_l=block_l)
    attn_output = jnp.transpose(out_nle, (1, 0, 2))
    return attn_output, w_nls


# ---------------------------------------------------------------------------
# Pure-JAX reference + deterministic init
# ---------------------------------------------------------------------------
def multihead_attention_ref(query, key, value, params, num_heads):
    """Pure-JAX f32 reference replicating F.multi_head_attention_forward (default args)."""
    L, N, E = query.shape
    S = key.shape[0]
    hd = E // num_heads
    scale = float(hd) ** -0.5

    def proj(x, w, b):
        return jnp.einsum("tne,fe->tnf", x, w) + b

    Q = proj(query, params["wq"], params["bq"]) * scale
    K = proj(key, params["wk"], params["bk"])
    V = proj(value, params["wv"], params["bv"])

    def split_heads(x, T):
        return jnp.transpose(x.reshape(T, N * num_heads, hd), (1, 0, 2))

    Qh, Kh, Vh = split_heads(Q, L), split_heads(K, S), split_heads(V, S)
    scores = jnp.einsum("bld,bsd->bls", Qh, Kh)
    attn = jax.nn.softmax(scores, axis=-1)
    ctx = jnp.einsum("bls,bsd->bld", attn, Vh)
    ctx = jnp.transpose(ctx, (1, 0, 2)).reshape(L, N, E)
    out = jnp.einsum("lne,fe->lnf", ctx, params["wo"]) + params["bo"]
    w_avg = attn.reshape(N, num_heads, L, S).sum(axis=1) / num_heads
    return out, w_avg


def init_params(key, embed_dim):
    """Deterministic init mimicking nn.MultiheadAttention's shapes / _reset_parameters."""
    E = embed_dim
    k1, k2 = jax.random.split(key, 2)
    limit_in = math.sqrt(6.0 / (3 * E + E))
    in_proj_weight = jax.random.uniform(k1, (3 * E, E), jnp.float32, -limit_in, limit_in)
    in_proj_bias = jnp.zeros((3 * E,), jnp.float32)
    limit_out = 1.0 / math.sqrt(E)
    wo = jax.random.uniform(k2, (E, E), jnp.float32, -limit_out, limit_out)
    bo = jnp.zeros((E,), jnp.float32)
    return {
        "wq": in_proj_weight[0 * E:1 * E],
        "wk": in_proj_weight[1 * E:2 * E],
        "wv": in_proj_weight[2 * E:3 * E],
        "bq": in_proj_bias[0 * E:1 * E],
        "bk": in_proj_bias[1 * E:2 * E],
        "bv": in_proj_bias[2 * E:3 * E],
        "wo": wo,
        "bo": bo,
    }


if __name__ == "__main__":
    # Small shapes: L = S = 8, batch N = 2, embed_dim E = 32, num_heads = 4.
    L, S, N, E, H = 8, 8, 2, 32, 4

    root = jax.random.PRNGKey(0)
    kq, kk, kv, kp = jax.random.split(root, 4)
    query = jax.random.normal(kq, (L, N, E), jnp.float32)
    key = jax.random.normal(kk, (S, N, E), jnp.float32)
    value = jax.random.normal(kv, (S, N, E), jnp.float32)
    params = init_params(kp, E)

    ref_out, ref_w = multihead_attention_ref(query, key, value, params, H)

    # need_weights=True path (matches nn.MultiheadAttention default).
    attn_out, attn_w = multihead_attention_pallas(query, key, value, params, H,
                                                  need_weights=True)
    jax.block_until_ready((attn_out, attn_w))
    assert attn_out.shape == (L, N, E)
    assert attn_w.shape == (N, L, S)
    # Tolerances loosened vs. the f32 reference: all matmuls use bf16 MXU operands
    # (f32 accumulation).
    assert jnp.allclose(attn_out, ref_out, atol=5e-2, rtol=5e-2)
    assert jnp.allclose(attn_w, ref_w, atol=3e-2, rtol=3e-2)

    # need_weights=False fast path (bf16 exp, context-side normalization, no weights write).
    attn_out2, attn_w2 = multihead_attention_pallas(query, key, value, params, H,
                                                    need_weights=False)
    jax.block_until_ready(attn_out2)
    assert attn_w2 is None
    assert jnp.allclose(attn_out2, ref_out, atol=5e-2, rtol=5e-2)

    print("KERNEL_OK")
</pallas_src>

<mosaic_0001>
module attributes {stable_mosaic.version = 11 : i64} {
  func.func @mha_kernel(%arg0: i32, %arg1: i32, %arg2: memref<1x8x32xf32, #tpu.memory_space<vmem>>, %arg3: memref<1x8x32xf32, #tpu.memory_space<vmem>>, %arg4: memref<1x8x32xf32, #tpu.memory_space<vmem>>, %arg5: memref<32x32xbf16, #tpu.memory_space<vmem>>, %arg6: memref<32x32xbf16, #tpu.memory_space<vmem>>, %arg7: memref<32x32xbf16, #tpu.memory_space<vmem>>, %arg8: memref<1x32xf32, #tpu.memory_space<vmem>>, %arg9: memref<1x32xf32, #tpu.memory_space<vmem>>, %arg10: memref<1x32xf32, #tpu.memory_space<vmem>>, %arg11: memref<32x32xbf16, #tpu.memory_space<vmem>>, %arg12: memref<1x32xf32, #tpu.memory_space<vmem>>, %arg13: memref<1x8x32xf32, #tpu.memory_space<vmem>>, %arg14: memref<1x8x8xf32, #tpu.memory_space<vmem>>, %arg15: memref<4x8x8xbf16, #tpu.memory_space<vmem>>, %arg16: memref<4x8x8xbf16, #tpu.memory_space<vmem>>, %arg17: memref<4x8x8xbf16, #tpu.memory_space<vmem>>, %arg18: memref<8x32xbf16, #tpu.memory_space<vmem>>) attributes {dimension_semantics = [#tpu.dimension_semantics<parallel>, #tpu.dimension_semantics<arbitrary>], iteration_bounds = array<i64: 2, 1>, scalar_prefetch = 0 : i64, scratch_operands = 4 : i64, tpu.core_type = #tpu.core_type<tc>, window_params = [{transform_indices = @transform_0, window_bounds = array<i64: 1, 8, 32>}, {transform_indices = @transform_1, window_bounds = array<i64: 1, 8, 32>}, {transform_indices = @transform_2, window_bounds = array<i64: 1, 8, 32>}, {pipeline_mode = #tpu.pipeline_mode<synchronous>, transform_indices = @transform_3, window_bounds = array<i64: 32, 32>}, {pipeline_mode = #tpu.pipeline_mode<synchronous>, transform_indices = @transform_4, window_bounds = array<i64: 32, 32>}, {pipeline_mode = #tpu.pipeline_mode<synchronous>, transform_indices = @transform_5, window_bounds = array<i64: 32, 32>}, {pipeline_mode = #tpu.pipeline_mode<synchronous>, transform_indices = @transform_6, window_bounds = array<i64: 1, 32>}, {pipeline_mode = #tpu.pipeline_mode<synchronous>, transform_indices = @transform_7, window_bounds = array<i64: 1, 32>}, {pipeline_mode = #tpu.pipeline_mode<synchronous>, transform_indices = @transform_8, window_bounds = array<i64: 1, 32>}, {pipeline_mode = #tpu.pipeline_mode<synchronous>, transform_indices = @transform_9, window_bounds = array<i64: 32, 32>}, {pipeline_mode = #tpu.pipeline_mode<synchronous>, transform_indices = @transform_10, window_bounds = array<i64: 1, 32>}, {transform_indices = @transform_11, window_bounds = array<i64: 1, 8, 32>}, {transform_indices = @transform_12, window_bounds = array<i64: 1, 8, 8>}]} {
    %c0_i32 = arith.constant 0 : i32
    %0 = arith.cmpi eq, %arg1, %c0_i32 : i32
    %1 = arith.extui %0 : i1 to i32
    %c0_i32_0 = arith.constant 0 : i32
    %2 = arith.cmpi ne, %1, %c0_i32_0 : i32
    scf.if %2 {
      %c0_49 = arith.constant 0 : index
      %c0_50 = arith.constant 0 : index
      %c0_51 = arith.constant 0 : index
      %74 = vector.load %arg3[%c0_49, %c0_50, %c0_51] : memref<1x8x32xf32, #tpu.memory_space<vmem>>, vector<1x8x32xf32>
      %75 = vector.shape_cast %74 : vector<1x8x32xf32> to vector<8x32xf32>
      %76 = arith.truncf %75 : vector<8x32xf32> to vector<8x32xbf16>
      %c0_52 = arith.constant 0 : index
      %c0_53 = arith.constant 0 : index
      %c0_54 = arith.constant 0 : index
      %77 = vector.load %arg4[%c0_52, %c0_53, %c0_54] : memref<1x8x32xf32, #tpu.memory_space<vmem>>, vector<1x8x32xf32>
      %78 = vector.shape_cast %77 : vector<1x8x32xf32> to vector<8x32xf32>
      %79 = arith.truncf %78 : vector<8x32xf32> to vector<8x32xbf16>
      %c0_55 = arith.constant 0 : index
      %c0_56 = arith.constant 0 : index
      %80 = vector.load %arg6[%c0_55, %c0_56] : memref<32x32xbf16, #tpu.memory_space<vmem>>, vector<32x32xbf16>
      %cst_57 = arith.constant dense<0.000000e+00> : vector<8x32xf32>
      %81 = tpu.matmul %76, %80, %cst_57 {dimension_numbers = #tpu.dot_dimension_numbers<[1], [0], [0], [1], [0, 0, 1, 1], [], []>} : vector<8x32xbf16>, vector<32x32xbf16>, vector<8x32xf32> -> vector<8x32xf32>
      %c0_58 = arith.constant 0 : index
      %c0_59 = arith.constant 0 : index
      %82 = vector.load %arg9[%c0_58, %c0_59] : memref<1x32xf32, #tpu.memory_space<vmem>>, vector<1x32xf32>
      %83 = vector.broadcast %82 : vector<1x32xf32> to vector<8x32xf32>
      %84 = arith.addf %81, %83 : vector<8x32xf32>
      %c0_60 = arith.constant 0 : index
      %c0_61 = arith.constant 0 : index
      %85 = vector.load %arg7[%c0_60, %c0_61] : memref<32x32xbf16, #tpu.memory_space<vmem>>, vector<32x32xbf16>
      %cst_62 = arith.constant dense<0.000000e+00> : vector<8x32xf32>
      %86 = tpu.matmul %79, %85, %cst_62 {dimension_numbers = #tpu.dot_dimension_numbers<[1], [0], [0], [1], [0, 0, 1, 1], [], []>} : vector<8x32xbf16>, vector<32x32xbf16>, vector<8x32xf32> -> vector<8x32xf32>
      %c0_63 = arith.constant 0 : index
      %c0_64 = arith.constant 0 : index
      %87 = vector.load %arg10[%c0_63, %c0_64] : memref<1x32xf32, #tpu.memory_space<vmem>>, vector<1x32xf32>
      %88 = vector.broadcast %87 : vector<1x32xf32> to vector<8x32xf32>
      %89 = arith.addf %86, %88 : vector<8x32xf32>
      %90 = arith.truncf %84 : vector<8x32xf32> to vector<8x32xbf16>
      %91 = arith.truncf %89 : vector<8x32xf32> to vector<8x32xbf16>
      %92 = vector.extract_strided_slice %90 {offsets = [0, 0], sizes = [8, 8], strides = [1, 1]} : vector<8x32xbf16> to vector<8x8xbf16>
      %c0_65 = arith.constant 0 : index
      %c0_66 = arith.constant 0 : index
      %c0_67 = arith.constant 0 : index
      %93 = vector.load %arg16[%c0_65, %c0_66, %c0_67] : memref<4x8x8xbf16, #tpu.memory_space<vmem>>, vector<1x8x8xbf16>
      %94 = vector.shape_cast %93 : vector<1x8x8xbf16> to vector<8x8xbf16>
      %95 = vector.shape_cast %92 : vector<8x8xbf16> to vector<1x8x8xbf16>
      tpu.vector_store %arg16[%c0_65, %c0_66, %c0_67], %95 {strides = array<i32>} : memref<4x8x8xbf16, #tpu.memory_space<vmem>>, vector<1x8x8xbf16>,
      %96 = vector.extract_strided_slice %91 {offsets = [0, 0], sizes = [8, 8], strides = [1, 1]} : vector<8x32xbf16> to vector<8x8xbf16>
      %c0_68 = arith.constant 0 : index
      %c0_69 = arith.constant 0 : index
      %c0_70 = arith.constant 0 : index
      %97 = vector.load %arg17[%c0_68, %c0_69, %c0_70] : memref<4x8x8xbf16, #tpu.memory_space<vmem>>, vector<1x8x8xbf16>
      %98 = vector.shape_cast %97 : vector<1x8x8xbf16> to vector<8x8xbf16>
      %99 = vector.shape_cast %96 : vector<8x8xbf16> to vector<1x8x8xbf16>
      tpu.vector_store %arg17[%c0_68, %c0_69, %c0_70], %99 {strides = array<i32>} : memref<4x8x8xbf16, #tpu.memory_space<vmem>>, vector<1x8x8xbf16>,
      %100 = vector.extract_strided_slice %90 {offsets = [0, 8], sizes = [8, 8], strides = [1, 1]} : vector<8x32xbf16> to vector<8x8xbf16>
      %c1_71 = arith.constant 1 : index
      %c0_72 = arith.constant 0 : index
      %c0_73 = arith.constant 0 : index
      %101 = vector.load %arg16[%c1_71, %c0_72, %c0_73] : memref<4x8x8xbf16, #tpu.memory_space<vmem>>, vector<1x8x8xbf16>
      %102 = vector.shape_cast %101 : vector<1x8x8xbf16> to vector<8x8xbf16>
      %103 = vector.shape_cast %100 : vector<8x8xbf16> to vector<1x8x8xbf16>
      tpu.vector_store %arg16[%c1_71, %c0_72, %c0_73], %103 {strides = array<i32>} : memref<4x8x8xbf16, #tpu.memory_space<vmem>>, vector<1x8x8xbf16>,
      %104 = vector.extract_strided_slice %91 {offsets = [0, 8], sizes = [8, 8], strides = [1, 1]} : vector<8x32xbf16> to vector<8x8xbf16>
      %c1_74 = arith.constant 1 : index
      %c0_75 = arith.constant 0 : index
      %c0_76 = arith.constant 0 : index
      %105 = vector.load %arg17[%c1_74, %c0_75, %c0_76] : memref<4x8x8xbf16, #tpu.memory_space<vmem>>, vector<1x8x8xbf16>
      %106 = vector.shape_cast %105 : vector<1x8x8xbf16> to vector<8x8xbf16>
      %107 = vector.shape_cast %104 : vector<8x8xbf16> to vector<1x8x8xbf16>
      tpu.vector_store %arg17[%c1_74, %c0_75, %c0_76], %107 {strides = array<i32>} : memref<4x8x8xbf16, #tpu.memory_space<vmem>>, vector<1x8x8xbf16>,
      %108 = vector.extract_strided_slice %90 {offsets = [0, 16], sizes = [8, 8], strides = [1, 1]} : vector<8x32xbf16> to vector<8x8xbf16>
      %c2_77 = arith.constant 2 : index
      %c0_78 = arith.constant 0 : index
      %c0_79 = arith.constant 0 : index
      %109 = vector.load %arg16[%c2_77, %c0_78, %c0_79] : memref<4x8x8xbf16, #tpu.memory_space<vmem>>, vector<1x8x8xbf16>
      %110 = vector.shape_cast %109 : vector<1x8x8xbf16> to vector<8x8xbf16>
      %111 = vector.shape_cast %108 : vector<8x8xbf16> to vector<1x8x8xbf16>
      tpu.vector_store %arg16[%c2_77, %c0_78, %c0_79], %111 {strides = array<i32>} : memref<4x8x8xbf16, #tpu.memory_space<vmem>>, vector<1x8x8xbf16>,
      %112 = vector.extract_strided_slice %91 {offsets = [0, 16], sizes = [8, 8], strides = [1, 1]} : vector<8x32xbf16> to vector<8x8xbf16>
      %c2_80 = arith.constant 2 : index
      %c0_81 = arith.constant 0 : index
      %c0_82 = arith.constant 0 : index
      %113 = vector.load %arg17[%c2_80, %c0_81, %c0_82] : memref<4x8x8xbf16, #tpu.memory_space<vmem>>, vector<1x8x8xbf16>
      %114 = vector.shape_cast %113 : vector<1x8x8xbf16> to vector<8x8xbf16>
      %115 = vector.shape_cast %112 : vector<8x8xbf16> to vector<1x8x8xbf16>
      tpu.vector_store %arg17[%c2_80, %c0_81, %c0_82], %115 {strides = array<i32>} : memref<4x8x8xbf16, #tpu.memory_space<vmem>>, vector<1x8x8xbf16>,
      %116 = vector.extract_strided_slice %90 {offsets = [0, 24], sizes = [8, 8], strides = [1, 1]} : vector<8x32xbf16> to vector<8x8xbf16>
      %c3_83 = arith.constant 3 : index
      %c0_84 = arith.constant 0 : index
      %c0_85 = arith.constant 0 : index
      %117 = vector.load %arg16[%c3_83, %c0_84, %c0_85] : memref<4x8x8xbf16, #tpu.memory_space<vmem>>, vector<1x8x8xbf16>
      %118 = vector.shape_cast %117 : vector<1x8x8xbf16> to vector<8x8xbf16>
      %119 = vector.shape_cast %116 : vector<8x8xbf16> to vector<1x8x8xbf16>
      tpu.vector_store %arg16[%c3_83, %c0_84, %c0_85], %119 {strides = array<i32>} : memref<4x8x8xbf16, #tpu.memory_space<vmem>>, vector<1x8x8xbf16>,
      %120 = vector.extract_strided_slice %91 {offsets = [0, 24], sizes = [8, 8], strides = [1, 1]} : vector<8x32xbf16> to vector<8x8xbf16>
      %c3_86 = arith.constant 3 : index
      %c0_87 = arith.constant 0 : index
      %c0_88 = arith.constant 0 : index
      %121 = vector.load %arg17[%c3_86, %c0_87, %c0_88] : memref<4x8x8xbf16, #tpu.memory_space<vmem>>, vector<1x8x8xbf16>
      %122 = vector.shape_cast %121 : vector<1x8x8xbf16> to vector<8x8xbf16>
      %123 = vector.shape_cast %120 : vector<8x8xbf16> to vector<1x8x8xbf16>
      tpu.vector_store %arg17[%c3_86, %c0_87, %c0_88], %123 {strides = array<i32>} : memref<4x8x8xbf16, #tpu.memory_space<vmem>>, vector<1x8x8xbf16>,
    } else {
    }
    %c0 = arith.constant 0 : index
    %c0_1 = arith.constant 0 : index
    %c0_2 = arith.constant 0 : index
    %3 = vector.load %arg2[%c0, %c0_1, %c0_2] : memref<1x8x32xf32, #tpu.memory_space<vmem>>, vector<1x8x32xf32>
    %4 = vector.shape_cast %3 : vector<1x8x32xf32> to vector<8x32xf32>
    %5 = arith.truncf %4 : vector<8x32xf32> to vector<8x32xbf16>
    %c0_3 = arith.constant 0 : index
    %c0_4 = arith.constant 0 : index
    %6 = vector.load %arg5[%c0_3, %c0_4] : memref<32x32xbf16, #tpu.memory_space<vmem>>, vector<32x32xbf16>
    %cst = arith.constant dense<0.000000e+00> : vector<8x32xf32>
    %7 = tpu.matmul %5, %6, %cst {dimension_numbers = #tpu.dot_dimension_numbers<[1], [0], [0], [1], [0, 0, 1, 1], [], []>} : vector<8x32xbf16>, vector<32x32xbf16>, vector<8x32xf32> -> vector<8x32xf32>
    %c0_5 = arith.constant 0 : index
    %c0_6 = arith.constant 0 : index
    %8 = vector.load %arg8[%c0_5, %c0_6] : memref<1x32xf32, #tpu.memory_space<vmem>>, vector<1x32xf32>
    %9 = vector.broadcast %8 : vector<1x32xf32> to vector<8x32xf32>
    %10 = arith.addf %7, %9 : vector<8x32xf32>
    %11 = arith.truncf %10 : vector<8x32xf32> to vector<8x32xbf16>
    %12 = vector.extract_strided_slice %11 {offsets = [0, 0], sizes = [8, 8], strides = [1, 1]} : vector<8x32xbf16> to vector<8x8xbf16>
    %c0_7 = arith.constant 0 : index
    %c0_8 = arith.constant 0 : index
    %c0_9 = arith.constant 0 : index
    %13 = vector.load %arg15[%c0_7, %c0_8, %c0_9] : memref<4x8x8xbf16, #tpu.memory_space<vmem>>, vector<1x8x8xbf16>
    %14 = vector.shape_cast %13 : vector<1x8x8xbf16> to vector<8x8xbf16>
    %15 = vector.shape_cast %12 : vector<8x8xbf16> to vector<1x8x8xbf16>
    tpu.vector_store %arg15[%c0_7, %c0_8, %c0_9], %15 {strides = array<i32>} : memref<4x8x8xbf16, #tpu.memory_space<vmem>>, vector<1x8x8xbf16>,
    %16 = vector.extract_strided_slice %11 {offsets = [0, 8], sizes = [8, 8], strides = [1, 1]} : vector<8x32xbf16> to vector<8x8xbf16>
    %c1 = arith.constant 1 : index
    %c0_10 = arith.constant 0 : index
    %c0_11 = arith.constant 0 : index
    %17 = vector.load %arg15[%c1, %c0_10, %c0_11] : memref<4x8x8xbf16, #tpu.memory_space<vmem>>, vector<1x8x8xbf16>
    %18 = vector.shape_cast %17 : vector<1x8x8xbf16> to vector<8x8xbf16>
    %19 = vector.shape_cast %16 : vector<8x8xbf16> to vector<1x8x8xbf16>
    tpu.vector_store %arg15[%c1, %c0_10, %c0_11], %19 {strides = array<i32>} : memref<4x8x8xbf16, #tpu.memory_space<vmem>>, vector<1x8x8xbf16>,
    %20 = vector.extract_strided_slice %11 {offsets = [0, 16], sizes = [8, 8], strides = [1, 1]} : vector<8x32xbf16> to vector<8x8xbf16>
    %c2 = arith.constant 2 : index
    %c0_12 = arith.constant 0 : index
    %c0_13 = arith.constant 0 : index
    %21 = vector.load %arg15[%c2, %c0_12, %c0_13] : memref<4x8x8xbf16, #tpu.memory_space<vmem>>, vector<1x8x8xbf16>
    %22 = vector.shape_cast %21 : vector<1x8x8xbf16> to vector<8x8xbf16>
    %23 = vector.shape_cast %20 : vector<8x8xbf16> to vector<1x8x8xbf16>
    tpu.vector_store %arg15[%c2, %c0_12, %c0_13], %23 {strides = array<i32>} : memref<4x8x8xbf16, #tpu.memory_space<vmem>>, vector<1x8x8xbf16>,
    %24 = vector.extract_strided_slice %11 {offsets = [0, 24], sizes = [8, 8], strides = [1, 1]} : vector<8x32xbf16> to vector<8x8xbf16>
    %c3 = arith.constant 3 : index
    %c0_14 = arith.constant 0 : index
    %c0_15 = arith.constant 0 : index
    %25 = vector.load %arg15[%c3, %c0_14, %c0_15] : memref<4x8x8xbf16, #tpu.memory_space<vmem>>, vector<1x8x8xbf16>
    %26 = vector.shape_cast %25 : vector<1x8x8xbf16> to vector<8x8xbf16>
    %27 = vector.shape_cast %24 : vector<8x8xbf16> to vector<1x8x8xbf16>
    tpu.vector_store %arg15[%c3, %c0_14, %c0_15], %27 {strides = array<i32>} : memref<4x8x8xbf16, #tpu.memory_space<vmem>>, vector<1x8x8xbf16>,
    %c0_16 = arith.constant 0 : index
    %c0_17 = arith.constant 0 : index
    %c0_18 = arith.constant 0 : index
    %28 = vector.load %arg15[%c0_16, %c0_17, %c0_18] : memref<4x8x8xbf16, #tpu.memory_space<vmem>>, vector<4x8x8xbf16>
    %c0_19 = arith.constant 0 : index
    %c0_20 = arith.constant 0 : index
    %c0_21 = arith.constant 0 : index
    %29 = vector.load %arg16[%c0_19, %c0_20, %c0_21] : memref<4x8x8xbf16, #tpu.memory_space<vmem>>, vector<4x8x8xbf16>
    %c0_22 = arith.constant 0 : index
    %c0_23 = arith.constant 0 : index
    %c0_24 = arith.constant 0 : index
    %30 = vector.load %arg17[%c0_22, %c0_23, %c0_24] : memref<4x8x8xbf16, #tpu.memory_space<vmem>>, vector<4x8x8xbf16>
    "tpu.trace_start"() <{level = 10 : i32, message = "hld,hsd->hls"}> : () -> ()
    %cst_25 = arith.constant dense<0.000000e+00> : vector<4x8x8xf32>
    %31 = tpu.matmul %28, %29, %cst_25 {dimension_numbers = #tpu.dot_dimension_numbers<[2], [2], [1], [1], [0, 0, 0, 1, 1, 1], [0], [0]>} : vector<4x8x8xbf16>, vector<4x8x8xbf16>, vector<4x8x8xf32> -> vector<4x8x8xf32>
    "tpu.trace_stop"() : () -> ()
    %cst_26 = arith.constant dense<0xFF800000> : vector<4x8xf32>
    %32 = vector.multi_reduction <maximumf>, %31, %cst_26 [2] : vector<4x8x8xf32> to vector<4x8xf32>
    %33 = vector.shape_cast %32 : vector<4x8xf32> to vector<4x8x1xf32>
    %34 = vector.broadcast %33 : vector<4x8x1xf32> to vector<4x8x8xf32>
    %35 = arith.subf %31, %34 : vector<4x8x8xf32>
    %36 = math.exp %35 : vector<4x8x8xf32>
    %cst_27 = arith.constant dense<0.000000e+00> : vector<4x8xf32>
    %37 = vector.multi_reduction <add>, %36, %cst_27 [2] : vector<4x8x8xf32> to vector<4x8xf32>
    %38 = vector.shape_cast %37 : vector<4x8xf32> to vector<4x8x1xf32>
    %39 = vector.broadcast %38 : vector<4x8x1xf32> to vector<4x8x8xf32>
    %40 = arith.divf %36, %39 : vector<4x8x8xf32>
    %41 = arith.truncf %40 : vector<4x8x8xf32> to vector<4x8x8xbf16>
    "tpu.trace_start"() <{level = 10 : i32, message = "hls,hsd->hld"}> : () -> ()
    %cst_28 = arith.constant dense<0.000000e+00> : vector<4x8x8xf32>
    %42 = tpu.matmul %41, %30, %cst_28 {dimension_numbers = #tpu.dot_dimension_numbers<[2], [1], [1], [2], [0, 0, 0, 1, 1, 2], [0], [0]>} : vector<4x8x8xbf16>, vector<4x8x8xbf16>, vector<4x8x8xf32> -> vector<4x8x8xf32>
    "tpu.trace_stop"() : () -> ()
    %cst_29 = arith.constant dense<0.000000e+00> : vector<8x8xf32>
    %43 = vector.multi_reduction <add>, %40, %cst_29 [0] : vector<4x8x8xf32> to vector<8x8xf32>
    %44 = vector.extract_strided_slice %42 {offsets = [0, 0, 0], sizes = [1, 8, 8], strides = [1, 1, 1]} : vector<4x8x8xf32> to vector<1x8x8xf32>
    %45 = vector.shape_cast %44 : vector<1x8x8xf32> to vector<8x8xf32>
    %46 = arith.truncf %45 : vector<8x8xf32> to vector<8x8xbf16>
    %c0_30 = arith.constant 0 : index
    %c0_31 = arith.constant 0 : index
    %47 = vector.load %arg18[%c0_30, %c0_31] : memref<8x32xbf16, #tpu.memory_space<vmem>>, vector<8x8xbf16>
    tpu.vector_store %arg18[%c0_30, %c0_31], %46 {strides = array<i32>} : memref<8x32xbf16, #tpu.memory_space<vmem>>, vector<8x8xbf16>,
    %48 = vector.extract_strided_slice %42 {offsets = [1, 0, 0], sizes = [1, 8, 8], strides = [1, 1, 1]} : vector<4x8x8xf32> to vector<1x8x8xf32>
    %49 = vector.shape_cast %48 : vector<1x8x8xf32> to vector<8x8xf32>
    %50 = arith.truncf %49 : vector<8x8xf32> to vector<8x8xbf16>
    %c0_32 = arith.constant 0 : index
    %c8 = arith.constant 8 : index
    %51 = vector.load %arg18[%c0_32, %c8] : memref<8x32xbf16, #tpu.memory_space<vmem>>, vector<8x8xbf16>
    tpu.vector_store %arg18[%c0_32, %c8], %50 {strides = array<i32>} : memref<8x32xbf16, #tpu.memory_space<vmem>>, vector<8x8xbf16>,
    %52 = vector.extract_strided_slice %42 {offsets = [2, 0, 0], sizes = [1, 8, 8], strides = [1, 1, 1]} : vector<4x8x8xf32> to vector<1x8x8xf32>
    %53 = vector.shape_cast %52 : vector<1x8x8xf32> to vector<8x8xf32>
    %54 = arith.truncf %53 : vector<8x8xf32> to vector<8x8xbf16>
    %c0_33 = arith.constant 0 : index
    %c16 = arith.constant 16 : index
    %55 = vector.load %arg18[%c0_33, %c16] : memref<8x32xbf16, #tpu.memory_space<vmem>>, vector<8x8xbf16>
    tpu.vector_store %arg18[%c0_33, %c16], %54 {strides = array<i32>} : memref<8x32xbf16, #tpu.memory_space<vmem>>, vector<8x8xbf16>,
    %56 = vector.extract_strided_slice %42 {offsets = [3, 0, 0], sizes = [1, 8, 8], strides = [1, 1, 1]} : vector<4x8x8xf32> to vector<1x8x8xf32>
    %57 = vector.shape_cast %56 : vector<1x8x8xf32> to vector<8x8xf32>
    %58 = arith.truncf %57 : vector<8x8xf32> to vector<8x8xbf16>
    %c0_34 = arith.constant 0 : index
    %c24 = arith.constant 24 : index
    %59 = vector.load %arg18[%c0_34, %c24] : memref<8x32xbf16, #tpu.memory_space<vmem>>, vector<8x8xbf16>
    tpu.vector_store %arg18[%c0_34, %c24], %58 {strides = array<i32>} : memref<8x32xbf16, #tpu.memory_space<vmem>>, vector<8x8xbf16>,
    %c0_35 = arith.constant 0 : index
    %c0_36 = arith.constant 0 : index
    %60 = vector.load %arg18[%c0_35, %c0_36] : memref<8x32xbf16, #tpu.memory_space<vmem>>, vector<8x32xbf16>
    %c0_37 = arith.constant 0 : index
    %c0_38 = arith.constant 0 : index
    %61 = vector.load %arg11[%c0_37, %c0_38] : memref<32x32xbf16, #tpu.memory_space<vmem>>, vector<32x32xbf16>
    %cst_39 = arith.constant dense<0.000000e+00> : vector<8x32xf32>
    %62 = tpu.matmul %60, %61, %cst_39 {dimension_numbers = #tpu.dot_dimension_numbers<[1], [0], [0], [1], [0, 0, 1, 1], [], []>} : vector<8x32xbf16>, vector<32x32xbf16>, vector<8x32xf32> -> vector<8x32xf32>
    %c0_40 = arith.constant 0 : index
    %c0_41 = arith.constant 0 : index
    %63 = vector.load %arg12[%c0_40, %c0_41] : memref<1x32xf32, #tpu.memory_space<vmem>>, vector<1x32xf32>
    %64 = vector.broadcast %63 : vector<1x32xf32> to vector<8x32xf32>
    %65 = arith.addf %62, %64 : vector<8x32xf32>
    %c0_42 = arith.constant 0 : index
    %c0_43 = arith.constant 0 : index
    %c0_44 = arith.constant 0 : index
    %66 = vector.load %arg13[%c0_42, %c0_43, %c0_44] : memref<1x8x32xf32, #tpu.memory_space<vmem>>, vector<1x8x32xf32>
    %67 = vector.shape_cast %66 : vector<1x8x32xf32> to vector<8x32xf32>
    %68 = vector.shape_cast %65 : vector<8x32xf32> to vector<1x8x32xf32>
    tpu.vector_store %arg13[%c0_42, %c0_43, %c0_44], %68 {strides = array<i32>} : memref<1x8x32xf32, #tpu.memory_space<vmem>>, vector<1x8x32xf32>,
    %cst_45 = arith.constant 2.500000e-01 : f32
    %69 = vector.broadcast %cst_45 : f32 to vector<8x8xf32>
    %70 = arith.mulf %43, %69 : vector<8x8xf32>
    %c0_46 = arith.constant 0 : index
    %c0_47 = arith.constant 0 : index
    %c0_48 = arith.constant 0 : index
    %71 = vector.load %arg14[%c0_46, %c0_47, %c0_48] : memref<1x8x8xf32, #tpu.memory_space<vmem>>, vector<1x8x8xf32>
    %72 = vector.shape_cast %71 : vector<1x8x8xf32> to vector<8x8xf32>
    %73 = vector.shape_cast %70 : vector<8x8xf32> to vector<1x8x8xf32>
    tpu.vector_store %arg14[%c0_46, %c0_47, %c0_48], %73 {strides = array<i32>} : memref<1x8x8xf32, #tpu.memory_space<vmem>>, vector<1x8x8xf32>,
    return
  }
  func.func @transform_0(%arg0: i32, %arg1: i32) -> (i32, i32, i32) {
    %c0_i32 = arith.constant 0 : i32
    %c0_i32_0 = arith.constant 0 : i32
    return %arg0, %arg1, %c0_i32 : i32, i32, i32
  }
  func.func @transform_1(%arg0: i32, %arg1: i32) -> (i32, i32, i32) {
    %c0_i32 = arith.constant 0 : i32
    %c0_i32_0 = arith.constant 0 : i32
    %c0_i32_1 = arith.constant 0 : i32
    return %arg0, %c0_i32, %c0_i32_0 : i32, i32, i32
  }
  func.func @transform_2(%arg0: i32, %arg1: i32) -> (i32, i32, i32) {
    %c0_i32 = arith.constant 0 : i32
    %c0_i32_0 = arith.constant 0 : i32
    %c0_i32_1 = arith.constant 0 : i32
    return %arg0, %c0_i32, %c0_i32_0 : i32, i32, i32
  }
  func.func @transform_3(%arg0: i32, %arg1: i32) -> (i32, i32) {
    %c0_i32 = arith.constant 0 : i32
    %c0_i32_0 = arith.constant 0 : i32
    %c0_i32_1 = arith.constant 0 : i32
    return %c0_i32, %c0_i32_0 : i32, i32
  }
  func.func @transform_4(%arg0: i32, %arg1: i32) -> (i32, i32) {
    %c0_i32 = arith.constant 0 : i32
    %c0_i32_0 = arith.constant 0 : i32
    %c0_i32_1 = arith.constant 0 : i32
    return %c0_i32, %c0_i32_0 : i32, i32
  }
  func.func @transform_5(%arg0: i32, %arg1: i32) -> (i32, i32) {
    %c0_i32 = arith.constant 0 : i32
    %c0_i32_0 = arith.constant 0 : i32
    %c0_i32_1 = arith.constant 0 : i32
    return %c0_i32, %c0_i32_0 : i32, i32
  }
  func.func @transform_6(%arg0: i32, %arg1: i32) -> (i32, i32) {
    %c0_i32 = arith.constant 0 : i32
    %c0_i32_0 = arith.constant 0 : i32
    %c0_i32_1 = arith.constant 0 : i32
    return %c0_i32, %c0_i32_0 : i32, i32
  }
  func.func @transform_7(%arg0: i32, %arg1: i32) -> (i32, i32) {
    %c0_i32 = arith.constant 0 : i32
    %c0_i32_0 = arith.constant 0 : i32
    %c0_i32_1 = arith.constant 0 : i32
    return %c0_i32, %c0_i32_0 : i32, i32
  }
  func.func @transform_8(%arg0: i32, %arg1: i32) -> (i32, i32) {
    %c0_i32 = arith.constant 0 : i32
    %c0_i32_0 = arith.constant 0 : i32
    %c0_i32_1 = arith.constant 0 : i32
    return %c0_i32, %c0_i32_0 : i32, i32
  }
  func.func @transform_9(%arg0: i32, %arg1: i32) -> (i32, i32) {
    %c0_i32 = arith.constant 0 : i32
    %c0_i32_0 = arith.constant 0 : i32
    %c0_i32_1 = arith.constant 0 : i32
    return %c0_i32, %c0_i32_0 : i32, i32
  }
  func.func @transform_10(%arg0: i32, %arg1: i32) -> (i32, i32) {
    %c0_i32 = arith.constant 0 : i32
    %c0_i32_0 = arith.constant 0 : i32
    %c0_i32_1 = arith.constant 0 : i32
    return %c0_i32, %c0_i32_0 : i32, i32
  }
  func.func @transform_11(%arg0: i32, %arg1: i32) -> (i32, i32, i32) {
    %c0_i32 = arith.constant 0 : i32
    %c0_i32_0 = arith.constant 0 : i32
    return %arg0, %arg1, %c0_i32 : i32, i32, i32
  }
  func.func @transform_12(%arg0: i32, %arg1: i32) -> (i32, i32, i32) {
    %c0_i32 = arith.constant 0 : i32
    %c0_i32_0 = arith.constant 0 : i32
    return %arg0, %arg1, %c0_i32 : i32, i32, i32
  }
}

</mosaic_0001>

<llo_original>
// kernel: tpu_custom_call.1
$region0: #{tpu_custom_call.1}
  #allocation0 [shape = 'u32[]', space=smem, size = 0x4, offset = 0x4, fixed_abs, tag = 'smem constant byte address 0x4 - core index']
  #allocation1 [shape = 'u32[144,128]{1,0:T(1,128)}', space=vmem, size = 0x12000, scoped, tag = 'internal scratch']
  #allocation2 [shape = 'bf16[4,8,8]{2,1,0:T(8,128)(2,1)}', space=vmem, size = 0x2000, scoped, tag = 'scratch operand']
  #allocation3 [shape = 'bf16[4,8,8]{2,1,0:T(8,128)(2,1)}', space=vmem, size = 0x2000, scoped, tag = 'scratch operand']
  #allocation4 [shape = 'bf16[4,8,8]{2,1,0:T(8,128)(2,1)}', space=vmem, size = 0x2000, scoped, tag = 'scratch operand']
  #allocation5 [shape = 'bf16[8,32]{1,0:T(8,128)(2,1)}', space=vmem, size = 0x800, scoped, tag = 'scratch operand']
  %s0 = inlined_call_operand.hbm [shape: f32[2,8,32], index: 0, kind: input, shape index: {}]
  %s1 = inlined_call_operand.hbm [shape: f32[2,8,32], index: 1, kind: input, shape index: {}]
  %s2 = inlined_call_operand.hbm [shape: f32[2,8,32], index: 2, kind: input, shape index: {}]
  %s3 = inlined_call_operand.hbm [shape: bf16[32,32], index: 3, kind: input, shape index: {}]
  %s4 = inlined_call_operand.hbm [shape: bf16[32,32], index: 4, kind: input, shape index: {}]
  %s5 = inlined_call_operand.hbm [shape: bf16[32,32], index: 5, kind: input, shape index: {}]
  %s6 = inlined_call_operand.hbm [shape: f32[1,32], index: 6, kind: input, shape index: {}]
  %s7 = inlined_call_operand.hbm [shape: f32[1,32], index: 7, kind: input, shape index: {}]
  %s8 = inlined_call_operand.hbm [shape: f32[1,32], index: 8, kind: input, shape index: {}]
  %s9 = inlined_call_operand.hbm [shape: bf16[32,32], index: 9, kind: input, shape index: {}]
  %s10 = inlined_call_operand.hbm [shape: f32[1,32], index: 10, kind: input, shape index: {}]
  %s11 = inlined_call_operand.hbm [shape: f32[2,8,32], index: 11, kind: output, shape index: {0}]
  %s12 = inlined_call_operand.hbm [shape: f32[2,8,8], index: 12, kind: output, shape index: {1}]
  %13 = xla_tuple %s11, %s12
  %s14 = sld [smem:[#allocation0]]
  $region133: #{tpu_custom_call.1} parent=0
    _
  %s16 = ssub.s32 1, %s14
  %s17 = scalar_select 0, %s16, %s14
  $region1: #{tpu_custom_call.1} parent=0
    #allocation6 [shape = 'u8[8192]{0}', space=vmem, size = 0x2000, scoped, tag = 'input window, operand 0']
    #allocation7 [shape = 's32[2]{0}', space=sflag, size = 0x8, scoped, tag = 'scoped memory for tpu_custom_call.1']
    #allocation8 [shape = 's32[2]{0}', space=sflag, size = 0x8, scoped, tag = 'scoped memory for tpu_custom_call.1']
    #allocation9 [shape = 'u8[8192]{0}', space=vmem, size = 0x2000, scoped, tag = 'input window, operand 1']
    #allocation10 [shape = 's32[2]{0}', space=sflag, size = 0x8, scoped, tag = 'scoped memory for tpu_custom_call.1']
    #allocation11 [shape = 'u8[8192]{0}', space=vmem, size = 0x2000, scoped, tag = 'input window, operand 2']
    #allocation12 [shape = 'u8[8192]{0}', space=vmem, size = 0x2000, scoped, tag = 'input window, operand 3, single buffered']
    #allocation13 [shape = 's32[1]{0}', space=sflag, size = 0x4, scoped, tag = 'scoped memory for tpu_custom_call.1']
    #allocation14 [shape = 'u8[8192]{0}', space=vmem, size = 0x2000, scoped, tag = 'input window, operand 4, single buffered']
    #allocation15 [shape = 'u8[8192]{0}', space=vmem, size = 0x2000, scoped, tag = 'input window, operand 5, single buffered']
    #allocation16 [shape = 's32[1]{0}', space=sflag, size = 0x4, scoped, tag = 'scoped memory for tpu_custom_call.1']
    #allocation17 [shape = 'u8[512]{0}', space=vmem, size = 0x400, scoped, tag = 'input window, operand 6, single buffered']
    #allocation18 [shape = 'u8[512]{0}', space=vmem, size = 0x400, scoped, tag = 'input window, operand 7, single buffered']
    #allocation19 [shape = 's32[1]{0}', space=sflag, size = 0x4, scoped, tag = 'scoped memory for tpu_custom_call.1']
    #allocation20 [shape = 'u8[512]{0}', space=vmem, size = 0x400, scoped, tag = 'input window, operand 8, single buffered']
    #allocation21 [shape = 'u8[8192]{0}', space=vmem, size = 0x2000, scoped, tag = 'input window, operand 9, single buffered']
    #allocation22 [shape = 's32[1]{0}', space=sflag, size = 0x4, scoped, tag = 'scoped memory for tpu_custom_call.1']
    #allocation23 [shape = 'u8[512]{0}', space=vmem, size = 0x400, scoped, tag = 'input window, operand 10, single buffered']
    #allocation24 [shape = 'u8[8192]{0}', space=vmem, size = 0x2000, scoped, tag = 'output window, operand 0']
    #allocation25 [shape = 'u8[8192]{0}', space=vmem, size = 0x2000, scoped, tag = 'output window, operand 1']
    #allocation26 [shape = 's32[2]{0}', space=sflag, size = 0x8, scoped, tag = 'scoped memory for tpu_custom_call.1']
    %18 = vsyncpa [#allocation7], 0
    %s19 = scalar_lea.sflag [#allocation7], 1
    %20 = vsyncpa %s19, 0
    %21 = vsyncpa [#allocation10], 0
    %s22 = scalar_lea.sflag [#allocation10], 1
    %23 = vsyncpa %s22, 0
    %24 = vsyncpa [#allocation13], 0
    %25 = vsyncpa [#allocation16], 0
    %26 = vsyncpa [#allocation19], 0
    %27 = vsyncpa [#allocation22], 0
    %28 = vsyncpa [#allocation8], 0
    %s29 = scalar_lea.sflag [#allocation8], 1
    %30 = vsyncpa %s29, 0
    %31 = vsyncpa [#allocation26], 0
    %s32 = scalar_lea.sflag [#allocation26], 1
    %33 = vsyncpa %s32, 0
    loop: start=0, step=1, limit=4
    $region2: #{tpu_custom_call.1} parent=1 // loop_pre_header
      _
    $region3: #{tpu_custom_call.1} parent=1 // loop_header
      %s35 = sphi 0, %s39
      %p36 = scmp.ge.s32.totalorder %s35, 4
      %s42 = sphi 0, %s54
      %s43 = sphi 0, %s50
      %s44 = sphi 0, %s42
      %s45 = sphi 0, %s43
      %s46 = sphi 0, %s44
      %s47 = sphi 0, %s45
      %s59 = sphi 0, %s61
      %s62 = sphi 0, %s59
      %s63 = sphi 0, %s62
      %s79 = sphi 0, %s63
      %s85 = sphi 0, %s87
      %s88 = sphi 0, %s85
      %s89 = sphi 0, %s88
      %s105 = sphi 0, %s89
      %s111 = sphi 0, %s113
      %s114 = sphi 0, %s111
      %s115 = sphi 0, %s114
      %s131 = sphi 0, %s115
      %s135 = sphi 0, %s135
      %s137 = sphi 0, %s135
      %s138 = sphi 0, %s137
      %s152 = sphi 0, %s138
      %s156 = sphi 0, %s156
      %s158 = sphi 0, %s156
      %s159 = sphi 0, %s158
      %s173 = sphi 0, %s159
      %s177 = sphi 0, %s177
      %s179 = sphi 0, %s177
      %s180 = sphi 0, %s179
      %s194 = sphi 0, %s180
      %s198 = sphi 0, %s198
      %s200 = sphi 0, %s198
      %s201 = sphi 0, %s200
      %s215 = sphi 0, %s201
      %s219 = sphi 0, %s219
      %s221 = sphi 0, %s219
      %s222 = sphi 0, %s221
      %s236 = sphi 0, %s222
      %s240 = sphi 0, %s240
      %s242 = sphi 0, %s240
      %s243 = sphi 0, %s242
      %s257 = sphi 0, %s243
      %s261 = sphi 0, %s261
      %s263 = sphi 0, %s261
      %s264 = sphi 0, %s263
      %s278 = sphi 0, %s264
      %s282 = sphi 0, %s282
      %s284 = sphi 0, %s282
      %s285 = sphi 0, %s284
      %s299 = sphi 0, %s285
      %s307 = sphi 0, %s309
      %s310 = sphi 0, %s307
      %s311 = sphi 0, %s310
      %s327 = sphi 0, %s311
      %s335 = sphi 0, %s337
      %s338 = sphi 0, %s335
      %s339 = sphi 0, %s338
      %s355 = sphi 0, %s339
    $region4: #{tpu_custom_call.1} parent=1 // loop_header_branch
      %38 = sbr.rel (%p36) target = $region8
    $region5: #{tpu_custom_call.1} parent=1 // loop_body
      %s40 = ssub.s32 %s35, 1
      %s41 = ssub.s32 %s35, 2
      %s48 = sadd.s32 1, %s43
      %p49 = scmp.ge.s32.totalorder %s48, 1
      %s50 = scalar_select %p49, 0, %s48
      %s51 = sadd.s32 1, %s42
      %s52 = scalar_select %p49, %s51, %s42
      %p53 = scmp.ge.s32.totalorder %s52, 2
      %s54 = scalar_select %p53, 0, %s52
      %s55 = ssub.s32 %s42, %s54
      %s56 = ssub.s32 %s43, %s50
      %s57 = sor.u32 %s55, %s56
      %p58 = scmp.eq.s32.totalorder %s57, 0
      %s60 = sadd.s32 %s59, 1
      %s61 = scalar_select %p58, %s59, %s60
      %p64 = pneg %p58
      %p65 = scmp.eq.s32.totalorder %s35, 1
      %p66 = por %p64, %p65
      %p67 = scmp.ne.s32.totalorder %s59, %s62
      %p68 = scmp.eq.s32.totalorder %s35, 0
      %p69 = por %p67, %p68
      %p70 = scmp.ne.s32.totalorder %s59, %s62
      %p71 = scmp.eq.s32.totalorder %s40, 1
      %p72 = por %p70, %p71
      %p73 = scmp.ne.s32.totalorder %s62, %s63
      %p74 = scmp.eq.s32.totalorder %s40, 0
      %p75 = por %p73, %p74
      %p76 = scmp.ne.s32.totalorder %s62, %s63
      %p77 = scmp.eq.s32.totalorder %s41, 1
      %p78 = por %p76, %p77
      %p80 = scmp.ne.s32.totalorder %s63, %s79
      %p81 = scmp.eq.s32.totalorder %s41, 0
      %p82 = por %p80, %p81
      %s83 = ssub.s32 %s42, %s54
      %p84 = scmp.eq.s32.totalorder %s83, 0
      %s86 = sadd.s32 %s85, 1
      %s87 = scalar_select %p84, %s85, %s86
      %p90 = pneg %p84
      %p91 = scmp.eq.s32.totalorder %s35, 1
      %p92 = por %p90, %p91
      %p93 = scmp.ne.s32.totalorder %s85, %s88
      %p94 = scmp.eq.s32.totalorder %s35, 0
      %p95 = por %p93, %p94
      %p96 = scmp.ne.s32.totalorder %s85, %s88
      %p97 = scmp.eq.s32.totalorder %s40, 1
      %p98 = por %p96, %p97
      %p99 = scmp.ne.s32.totalorder %s88, %s89
      %p100 = scmp.eq.s32.totalorder %s40, 0
      %p101 = por %p99, %p100
      %p102 = scmp.ne.s32.totalorder %s88, %s89
      %p103 = scmp.eq.s32.totalorder %s41, 1
      %p104 = por %p102, %p103
      %p106 = scmp.ne.s32.totalorder %s89, %s105
      %p107 = scmp.eq.s32.totalorder %s41, 0
      %p108 = por %p106, %p107
      %s109 = ssub.s32 %s42, %s54
      %p110 = scmp.eq.s32.totalorder %s109, 0
      %s112 = sadd.s32 %s111, 1
      %s113 = scalar_select %p110, %s111, %s112
      %p116 = pneg %p110
      %p117 = scmp.eq.s32.totalorder %s35, 1
      %p118 = por %p116, %p117
      %p119 = scmp.ne.s32.totalorder %s111, %s114
      %p120 = scmp.eq.s32.totalorder %s35, 0
      %p121 = por %p119, %p120
      %p122 = scmp.ne.s32.totalorder %s111, %s114
      %p123 = scmp.eq.s32.totalorder %s40, 1
      %p124 = por %p122, %p123
      %p125 = scmp.ne.s32.totalorder %s114, %s115
      %p126 = scmp.eq.s32.totalorder %s40, 0
      %p127 = por %p125, %p126
      %p128 = scmp.ne.s32.totalorder %s114, %s115
      %p129 = scmp.eq.s32.totalorder %s41, 1
      %p130 = por %p128, %p129
      %p132 = scmp.ne.s32.totalorder %s115, %s131
      %p133 = scmp.eq.s32.totalorder %s41, 0
      %p134 = por %p132, %p133
      %s136 = sadd.s32 %s135, 1
      %p139 = scmp.eq.s32.totalorder %s35, 1
      %p140 = scmp.ne.s32.totalorder %s135, %s137
      %p141 = scmp.eq.s32.totalorder %s35, 0
      %p142 = por %p140, %p141
      %p143 = scmp.ne.s32.totalorder %s135, %s137
      %p144 = scmp.eq.s32.totalorder %s40, 1
      %p145 = por %p143, %p144
      %p146 = scmp.ne.s32.totalorder %s137, %s138
      %p147 = scmp.eq.s32.totalorder %s40, 0
      %p148 = por %p146, %p147
      %p149 = scmp.ne.s32.totalorder %s137, %s138
      %p150 = scmp.eq.s32.totalorder %s41, 1
      %p151 = por %p149, %p150
      %p153 = scmp.ne.s32.totalorder %s138, %s152
      %p154 = scmp.eq.s32.totalorder %s41, 0
      %p155 = por %p153, %p154
      %s157 = sadd.s32 %s156, 1
      %p160 = scmp.eq.s32.totalorder %s35, 1
      %p161 = scmp.ne.s32.totalorder %s156, %s158
      %p162 = scmp.eq.s32.totalorder %s35, 0
      %p163 = por %p161, %p162
      %p164 = scmp.ne.s32.totalorder %s156, %s158
      %p165 = scmp.eq.s32.totalorder %s40, 1
      %p166 = por %p164, %p165
      %p167 = scmp.ne.s32.totalorder %s158, %s159
      %p168 = scmp.eq.s32.totalorder %s40, 0
      %p169 = por %p167, %p168
      %p170 = scmp.ne.s32.totalorder %s158, %s159
      %p171 = scmp.eq.s32.totalorder %s41, 1
      %p172 = por %p170, %p171
      %p174 = scmp.ne.s32.totalorder %s159, %s173
      %p175 = scmp.eq.s32.totalorder %s41, 0
      %p176 = por %p174, %p175
      %s178 = sadd.s32 %s177, 1
      %p181 = scmp.eq.s32.totalorder %s35, 1
      %p182 = scmp.ne.s32.totalorder %s177, %s179
      %p183 = scmp.eq.s32.totalorder %s35, 0
      %p184 = por %p182, %p183
      %p185 = scmp.ne.s32.totalorder %s177, %s179
      %p186 = scmp.eq.s32.totalorder %s40, 1
      %p187 = por %p185, %p186
      %p188 = scmp.ne.s32.totalorder %s179, %s180
      %p189 = scmp.eq.s32.totalorder %s40, 0
      %p190 = por %p188, %p189
      %p191 = scmp.ne.s32.totalorder %s179, %s180
      %p192 = scmp.eq.s32.totalorder %s41, 1
      %p193 = por %p191, %p192
      %p195 = scmp.ne.s32.totalorder %s180, %s194
      %p196 = scmp.eq.s32.totalorder %s41, 0
      %p197 = por %p195, %p196
      %s199 = sadd.s32 %s198, 1
      %p202 = scmp.eq.s32.totalorder %s35, 1
      %p203 = scmp.ne.s32.totalorder %s198, %s200
      %p204 = scmp.eq.s32.totalorder %s35, 0
      %p205 = por %p203, %p204
      %p206 = scmp.ne.s32.totalorder %s198, %s200
      %p207 = scmp.eq.s32.totalorder %s40, 1
      %p208 = por %p206, %p207
      %p209 = scmp.ne.s32.totalorder %s200, %s201
      %p210 = scmp.eq.s32.totalorder %s40, 0
      %p211 = por %p209, %p210
      %p212 = scmp.ne.s32.totalorder %s200, %s201
      %p213 = scmp.eq.s32.totalorder %s41, 1
      %p214 = por %p212, %p213
      %p216 = scmp.ne.s32.totalorder %s201, %s215
      %p217 = scmp.eq.s32.totalorder %s41, 0
      %p218 = por %p216, %p217
      %s220 = sadd.s32 %s219, 1
      %p223 = scmp.eq.s32.totalorder %s35, 1
      %p224 = scmp.ne.s32.totalorder %s219, %s221
      %p225 = scmp.eq.s32.totalorder %s35, 0
      %p226 = por %p224, %p225
      %p227 = scmp.ne.s32.totalorder %s219, %s221
      %p228 = scmp.eq.s32.totalorder %s40, 1
      %p229 = por %p227, %p228
      %p230 = scmp.ne.s32.totalorder %s221, %s222
      %p231 = scmp.eq.s32.totalorder %s40, 0
      %p232 = por %p230, %p231
      %p233 = scmp.ne.s32.totalorder %s221, %s222
      %p234 = scmp.eq.s32.totalorder %s41, 1
      %p235 = por %p233, %p234
      %p237 = scmp.ne.s32.totalorder %s222, %s236
      %p238 = scmp.eq.s32.totalorder %s41, 0
      %p239 = por %p237, %p238
      %s241 = sadd.s32 %s240, 1
      %p244 = scmp.eq.s32.totalorder %s35, 1
      %p245 = scmp.ne.s32.totalorder %s240, %s242
      %p246 = scmp.eq.s32.totalorder %s35, 0
      %p247 = por %p245, %p246
      %p248 = scmp.ne.s32.totalorder %s240, %s242
      %p249 = scmp.eq.s32.totalorder %s40, 1
      %p250 = por %p248, %p249
      %p251 = scmp.ne.s32.totalorder %s242, %s243
      %p252 = scmp.eq.s32.totalorder %s40, 0
      %p253 = por %p251, %p252
      %p254 = scmp.ne.s32.totalorder %s242, %s243
      %p255 = scmp.eq.s32.totalorder %s41, 1
      %p256 = por %p254, %p255
      %p258 = scmp.ne.s32.totalorder %s243, %s257
      %p259 = scmp.eq.s32.totalorder %s41, 0
      %p260 = por %p258, %p259
      %s262 = sadd.s32 %s261, 1
      %p265 = scmp.eq.s32.totalorder %s35, 1
      %p266 = scmp.ne.s32.totalorder %s261, %s263
      %p267 = scmp.eq.s32.totalorder %s35, 0
      %p268 = por %p266, %p267
      %p269 = scmp.ne.s32.totalorder %s261, %s263
      %p270 = scmp.eq.s32.totalorder %s40, 1
      %p271 = por %p269, %p270
      %p272 = scmp.ne.s32.totalorder %s263, %s264
      %p273 = scmp.eq.s32.totalorder %s40, 0
      %p274 = por %p272, %p273
      %p275 = scmp.ne.s32.totalorder %s263, %s264
      %p276 = scmp.eq.s32.totalorder %s41, 1
      %p277 = por %p275, %p276
      %p279 = scmp.ne.s32.totalorder %s264, %s278
      %p280 = scmp.eq.s32.totalorder %s41, 0
      %p281 = por %p279, %p280
      %s283 = sadd.s32 %s282, 1
      %p286 = scmp.eq.s32.totalorder %s35, 1
      %p287 = scmp.ne.s32.totalorder %s282, %s284
      %p288 = scmp.eq.s32.totalorder %s35, 0
      %p289 = por %p287, %p288
      %p290 = scmp.ne.s32.totalorder %s282, %s284
      %p291 = scmp.eq.s32.totalorder %s40, 1
      %p292 = por %p290, %p291
      %p293 = scmp.ne.s32.totalorder %s284, %s285
      %p294 = scmp.eq.s32.totalorder %s40, 0
      %p295 = por %p293, %p294
      %p296 = scmp.ne.s32.totalorder %s284, %s285
      %p297 = scmp.eq.s32.totalorder %s41, 1
      %p298 = por %p296, %p297
      %p300 = scmp.ne.s32.totalorder %s285, %s299
      %p301 = scmp.eq.s32.totalorder %s41, 0
      %p302 = por %p300, %p301
      %s303 = ssub.s32 %s42, %s54
      %s304 = ssub.s32 %s43, %s50
      %s305 = sor.u32 %s303, %s304
      %p306 = scmp.eq.s32.totalorder %s305, 0
      %s308 = sadd.s32 %s307, 1
      %s309 = scalar_select %p306, %s307, %s308
      %p312 = pneg %p306
      %p313 = scmp.eq.s32.totalorder %s35, 1
      %p314 = por %p312, %p313
      %p315 = scmp.ne.s32.totalorder %s307, %s310
      %p316 = scmp.eq.s32.totalorder %s35, 0
      %p317 = por %p315, %p316
      %p318 = scmp.ne.s32.totalorder %s307, %s310
      %p319 = scmp.eq.s32.totalorder %s40, 1
      %p320 = por %p318, %p319
      %p321 = scmp.ne.s32.totalorder %s310, %s311
      %p322 = scmp.eq.s32.totalorder %s40, 0
      %p323 = por %p321, %p322
      %p324 = scmp.ne.s32.totalorder %s310, %s311
      %p325 = scmp.eq.s32.totalorder %s41, 1
      %p326 = por %p324, %p325
      %p328 = scmp.ne.s32.totalorder %s311, %s327
      %p329 = scmp.eq.s32.totalorder %s41, 0
      %p330 = por %p328, %p329
      %s331 = ssub.s32 %s42, %s54
      %s332 = ssub.s32 %s43, %s50
      %s333 = sor.u32 %s331, %s332
      %p334 = scmp.eq.s32.totalorder %s333, 0
      %s336 = sadd.s32 %s335, 1
      %s337 = scalar_select %p334, %s335, %s336
      %p340 = pneg %p334
      %p341 = scmp.eq.s32.totalorder %s35, 1
      %p342 = por %p340, %p341
      %p343 = scmp.ne.s32.totalorder %s335, %s338
      %p344 = scmp.eq.s32.totalorder %s35, 0
      %p345 = por %p343, %p344
      %p346 = scmp.ne.s32.totalorder %s335, %s338
      %p347 = scmp.eq.s32.totalorder %s40, 1
      %p348 = por %p346, %p347
      %p349 = scmp.ne.s32.totalorder %s338, %s339
      %p350 = scmp.eq.s32.totalorder %s40, 0
      %p351 = por %p349, %p350
      %p352 = scmp.ne.s32.totalorder %s338, %s339
      %p353 = scmp.eq.s32.totalorder %s41, 1
      %p354 = por %p352, %p353
      %p356 = scmp.ne.s32.totalorder %s339, %s355
      %p357 = scmp.eq.s32.totalorder %s41, 0
      %p358 = por %p356, %p357
      %p359 = scmp.le.s32.totalorder 1, %s35
      %p360 = scmp.lt.s32.totalorder %s35, 3
      %p361 = pnand %p359, %p360
      %p362 = pneg %p361
      // Predicated region
      $region9: #{tpu_custom_call.1} parent=5 // pred_check
        _
      $region10: #{tpu_custom_call.1} parent=5 // pred_check_branch
        %364 = sbr.rel (%p361) target = $region12
      $region11: #{tpu_custom_call.1} parent=5 // pred_region
        %s365 = ssub.s32 %s35, 1
        // Predicated region
        $region13: #{tpu_custom_call.1} parent=11 // pred_check
          %p366 = pneg %p148
        $region14: #{tpu_custom_call.1} parent=11 // pred_check_branch
          %368 = sbr.rel (%p366) target = $region16
        $region15: #{tpu_custom_call.1} parent=11 // pred_region
          %s370 = ssub.s32 256, 256
          %371 = vsyncadd [#allocation13], %s370
          %s372 = sshll.u32 [#allocation12], 4
          %s373 = int_to_ptr.vmem [resolvable:$true] %s372
          %378 = dma.hbm_to_vmem [thread:$0]  %s3, 256, %s373, [#allocation13], 64, 64, 4
        $region16: #{tpu_custom_call.1} parent=11 // pred_fallthru
          _
        // Predicated region
        $region17: #{tpu_custom_call.1} parent=11 // pred_check
          %p379 = pneg %p169
        $region18: #{tpu_custom_call.1} parent=11 // pred_check_branch
          %381 = sbr.rel (%p379) target = $region20
        $region19: #{tpu_custom_call.1} parent=11 // pred_region
          %s383 = ssub.s32 256, 256
          %384 = vsyncadd [#allocation13], %s383
          %s385 = sshll.u32 [#allocation14], 4
          %s386 = int_to_ptr.vmem [resolvable:$true] %s385
          %391 = dma.hbm_to_vmem [thread:$0]  %s4, 256, %s386, [#allocation13], 64, 64, 4
        $region20: #{tpu_custom_call.1} parent=11 // pred_fallthru
          _
        // Predicated region
        $region21: #{tpu_custom_call.1} parent=11 // pred_check
          %p392 = pneg %p190
        $region22: #{tpu_custom_call.1} parent=11 // pred_check_branch
          %394 = sbr.rel (%p392) target = $region24
        $region23: #{tpu_custom_call.1} parent=11 // pred_region
          %s396 = ssub.s32 256, 256
          %397 = vsyncadd [#allocation16], %s396
          %s398 = sshll.u32 [#allocation15], 4
          %s399 = int_to_ptr.vmem [resolvable:$true] %s398
          %404 = dma.hbm_to_vmem [thread:$0]  %s5, 256, %s399, [#allocation16], 64, 64, 4
        $region24: #{tpu_custom_call.1} parent=11 // pred_fallthru
          _
        // Predicated region
        $region25: #{tpu_custom_call.1} parent=11 // pred_check
          %p405 = pneg %p211
        $region26: #{tpu_custom_call.1} parent=11 // pred_check_branch
          %407 = sbr.rel (%p405) target = $region28
        $region27: #{tpu_custom_call.1} parent=11 // pred_region
          %s409 = ssub.s32 16, 16
          %410 = vsyncadd [#allocation16], %s409
          %s412 = sshll.u32 [#allocation17], 4
          %s413 = int_to_ptr.vmem [resolvable:$true] %s412
          %415 = dma.hbm_to_vmem [thread:$0]  %s6, 16, %s413, [#allocation16]
        $region28: #{tpu_custom_call.1} parent=11 // pred_fallthru
          _
        // Predicated region
        $region29: #{tpu_custom_call.1} parent=11 // pred_check
          %p416 = pneg %p232
        $region30: #{tpu_custom_call.1} parent=11 // pred_check_branch
          %418 = sbr.rel (%p416) target = $region32
        $region31: #{tpu_custom_call.1} parent=11 // pred_region
          %s420 = ssub.s32 16, 16
          %421 = vsyncadd [#allocation19], %s420
          %s423 = sshll.u32 [#allocation18], 4
          %s424 = int_to_ptr.vmem [resolvable:$true] %s423
          %426 = dma.hbm_to_vmem [thread:$0]  %s7, 16, %s424, [#allocation19]
        $region32: #{tpu_custom_call.1} parent=11 // pred_fallthru
          _
        // Predicated region
        $region33: #{tpu_custom_call.1} parent=11 // pred_check
          %p427 = pneg %p253
        $region34: #{tpu_custom_call.1} parent=11 // pred_check_branch
          %429 = sbr.rel (%p427) target = $region36
        $region35: #{tpu_custom_call.1} parent=11 // pred_region
          %s431 = ssub.s32 16, 16
          %432 = vsyncadd [#allocation19], %s431
          %s434 = sshll.u32 [#allocation20], 4
          %s435 = int_to_ptr.vmem [resolvable:$true] %s434
          %437 = dma.hbm_to_vmem [thread:$0]  %s8, 16, %s435, [#allocation19]
        $region36: #{tpu_custom_call.1} parent=11 // pred_fallthru
          _
        // Predicated region
        $region37: #{tpu_custom_call.1} parent=11 // pred_check
          %p438 = pneg %p274
        $region38: #{tpu_custom_call.1} parent=11 // pred_check_branch
          %440 = sbr.rel (%p438) target = $region40
        $region39: #{tpu_custom_call.1} parent=11 // pred_region
          %s442 = ssub.s32 256, 256
          %443 = vsyncadd [#allocation22], %s442
          %s444 = sshll.u32 [#allocation21], 4
          %s445 = int_to_ptr.vmem [resolvable:$true] %s444
          %450 = dma.hbm_to_vmem [thread:$0]  %s9, 256, %s445, [#allocation22], 64, 64, 4
        $region40: #{tpu_custom_call.1} parent=11 // pred_fallthru
          _
        // Predicated region
        $region41: #{tpu_custom_call.1} parent=11 // pred_check
          %p451 = pneg %p295
        $region42: #{tpu_custom_call.1} parent=11 // pred_check_branch
          %453 = sbr.rel (%p451) target = $region44
        $region43: #{tpu_custom_call.1} parent=11 // pred_region
          %s455 = ssub.s32 16, 16
          %456 = vsyncadd [#allocation22], %s455
          %s458 = sshll.u32 [#allocation23], 4
          %s459 = int_to_ptr.vmem [resolvable:$true] %s458
          %461 = dma.hbm_to_vmem [thread:$0]  %s10, 16, %s459, [#allocation22]
        $region44: #{tpu_custom_call.1} parent=11 // pred_fallthru
          _
      $region12: #{tpu_custom_call.1} parent=5 // pred_fallthru
        _
      %p462 = scmp.lt.s32.totalorder %s35, 2
      // Predicated region
      $region45: #{tpu_custom_call.1} parent=5 // pred_check
        %p463 = pneg %p462
      $region46: #{tpu_custom_call.1} parent=5 // pred_check_branch
        %465 = sbr.rel (%p463) target = $region48
      $region47: #{tpu_custom_call.1} parent=5 // pred_region
        // Predicated region
        $region49: #{tpu_custom_call.1} parent=47 // pred_check
          %p466 = pneg %p69
        $region50: #{tpu_custom_call.1} parent=47 // pred_check_branch
          %468 = sbr.rel (%p466) target = $region52
        $region51: #{tpu_custom_call.1} parent=47 // pred_region
          %s469 = sand.u32 %s59, 1
          %s470 = scalar_lea.sflag [#allocation7], %s469
          %s471 = sand.u32 %s59, 1
          %s472 = smul.addr %s471, 8
          %s473 = scalar_lea.vmem [#allocation6], %s472
          %s475 = ssub.s32 128, 128
          %476 = vsyncadd %s470, %s475
          %s477 = sadd.s32 %s43, %s42
          %s478 = smul.addr %s477, 128
          %s479 = scalar_lea.hbm %s0, %s478
          %s481 = sshll.u32 %s473, 4
          %s482 = int_to_ptr.vmem [resolvable:$true] %s481
          %484 = dma.hbm_to_vmem [thread:$0]  %s479, 128, %s482, %s470
        $region52: #{tpu_custom_call.1} parent=47 // pred_fallthru
          _
        // Predicated region
        $region53: #{tpu_custom_call.1} parent=47 // pred_check
          %p485 = pneg %p95
        $region54: #{tpu_custom_call.1} parent=47 // pred_check_branch
          %487 = sbr.rel (%p485) target = $region56
        $region55: #{tpu_custom_call.1} parent=47 // pred_region
          %s488 = sand.u32 %s35, 1
          %s489 = scalar_lea.sflag [#allocation10], %s488
          %s490 = sand.u32 %s85, 1
          %s491 = smul.addr %s490, 8
          %s492 = scalar_lea.vmem [#allocation9], %s491
          %s494 = ssub.s32 128, 128
          %495 = vsyncadd %s489, %s494
          %s496 = smul.addr %s42, 128
          %s497 = scalar_lea.hbm %s1, %s496
          %s499 = sshll.u32 %s492, 4
          %s500 = int_to_ptr.vmem [resolvable:$true] %s499
          %502 = dma.hbm_to_vmem [thread:$0]  %s497, 128, %s500, %s489
        $region56: #{tpu_custom_call.1} parent=47 // pred_fallthru
          _
        // Predicated region
        $region57: #{tpu_custom_call.1} parent=47 // pred_check
          %p503 = pneg %p121
        $region58: #{tpu_custom_call.1} parent=47 // pred_check_branch
          %505 = sbr.rel (%p503) target = $region60
        $region59: #{tpu_custom_call.1} parent=47 // pred_region
          %s506 = sand.u32 %s35, 1
          %s507 = scalar_lea.sflag [#allocation10], %s506
          %s508 = sand.u32 %s111, 1
          %s509 = smul.addr %s508, 8
          %s510 = scalar_lea.vmem [#allocation11], %s509
          %s512 = ssub.s32 128, 128
          %513 = vsyncadd %s507, %s512
          %s514 = smul.addr %s42, 128
          %s515 = scalar_lea.hbm %s2, %s514
          %s517 = sshll.u32 %s510, 4
          %s518 = int_to_ptr.vmem [resolvable:$true] %s517
          %520 = dma.hbm_to_vmem [thread:$0]  %s515, 128, %s518, %s507
        $region60: #{tpu_custom_call.1} parent=47 // pred_fallthru
          _
      $region48: #{tpu_custom_call.1} parent=5 // pred_fallthru
        _
      %p521 = scmp.le.s32.totalorder 1, %s35
      %p522 = scmp.lt.s32.totalorder %s35, 3
      %p523 = pnand %p521, %p522
      %p524 = pneg %p523
      // Predicated region
      $region61: #{tpu_custom_call.1} parent=5 // pred_check
        _
      $region62: #{tpu_custom_call.1} parent=5 // pred_check_branch
        %526 = sbr.rel (%p523) target = $region64
      $region63: #{tpu_custom_call.1} parent=5 // pred_region
        %s527 = ssub.s32 %s35, 1
        %s528 = sand.u32 %s62, 1
        %s529 = scalar_lea.sflag [#allocation7], %s528
        %s530 = sand.u32 %s62, 1
        %s531 = smul.addr %s530, 8
        %s532 = scalar_lea.vmem [#allocation6], %s531
        // Predicated region
        $region65: #{tpu_custom_call.1} parent=63 // pred_check
          %p533 = pneg %p75
        $region66: #{tpu_custom_call.1} parent=63 // pred_check_branch
          %535 = sbr.rel (%p533) target = $region68
        $region67: #{tpu_custom_call.1} parent=63 // pred_region
          %536 = dma.done %s529, 128
        $region68: #{tpu_custom_call.1} parent=63 // pred_fallthru
          _
        %s537 = sand.u32 %s40, 1
        %s538 = scalar_lea.sflag [#allocation10], %s537
        %s539 = sand.u32 %s88, 1
        %s540 = smul.addr %s539, 8
        %s541 = scalar_lea.vmem [#allocation9], %s540
        // Predicated region
        $region69: #{tpu_custom_call.1} parent=63 // pred_check
          %p542 = pneg %p101
        $region70: #{tpu_custom_call.1} parent=63 // pred_check_branch
          %544 = sbr.rel (%p542) target = $region72
        $region71: #{tpu_custom_call.1} parent=63 // pred_region
          %545 = dma.done %s538, 128
        $region72: #{tpu_custom_call.1} parent=63 // pred_fallthru
          _
        %s546 = sand.u32 %s40, 1
        %s547 = scalar_lea.sflag [#allocation10], %s546
        %s548 = sand.u32 %s114, 1
        %s549 = smul.addr %s548, 8
        %s550 = scalar_lea.vmem [#allocation11], %s549
        // Predicated region
        $region73: #{tpu_custom_call.1} parent=63 // pred_check
          %p551 = pneg %p127
        $region74: #{tpu_custom_call.1} parent=63 // pred_check_branch
          %553 = sbr.rel (%p551) target = $region76
        $region75: #{tpu_custom_call.1} parent=63 // pred_region
          %554 = dma.done %s547, 128
        $region76: #{tpu_custom_call.1} parent=63 // pred_fallthru
          _
        // Predicated region
        $region77: #{tpu_custom_call.1} parent=63 // pred_check
          %p555 = pneg %p148
        $region78: #{tpu_custom_call.1} parent=63 // pred_check_branch
          %557 = sbr.rel (%p555) target = $region80
        $region79: #{tpu_custom_call.1} parent=63 // pred_region
          %558 = dma.done [#allocation13], 256
        $region80: #{tpu_custom_call.1} parent=63 // pred_fallthru
          _
        // Predicated region
        $region81: #{tpu_custom_call.1} parent=63 // pred_check
          %p559 = pneg %p169
        $region82: #{tpu_custom_call.1} parent=63 // pred_check_branch
          %561 = sbr.rel (%p559) target = $region84
        $region83: #{tpu_custom_call.1} parent=63 // pred_region
          %562 = dma.done [#allocation13], 256
        $region84: #{tpu_custom_call.1} parent=63 // pred_fallthru
          _
        // Predicated region
        $region85: #{tpu_custom_call.1} parent=63 // pred_check
          %p563 = pneg %p190
        $region86: #{tpu_custom_call.1} parent=63 // pred_check_branch
          %565 = sbr.rel (%p563) target = $region88
        $region87: #{tpu_custom_call.1} parent=63 // pred_region
          %566 = dma.done [#allocation16], 256
        $region88: #{tpu_custom_call.1} parent=63 // pred_fallthru
          _
        // Predicated region
        $region89: #{tpu_custom_call.1} parent=63 // pred_check
          %p567 = pneg %p211
        $region90: #{tpu_custom_call.1} parent=63 // pred_check_branch
          %569 = sbr.rel (%p567) target = $region92
        $region91: #{tpu_custom_call.1} parent=63 // pred_region
          %570 = dma.done [#allocation16], 16
        $region92: #{tpu_custom_call.1} parent=63 // pred_fallthru
          _
        // Predicated region
        $region93: #{tpu_custom_call.1} parent=63 // pred_check
          %p571 = pneg %p232
        $region94: #{tpu_custom_call.1} parent=63 // pred_check_branch
          %573 = sbr.rel (%p571) target = $region96
        $region95: #{tpu_custom_call.1} parent=63 // pred_region
          %574 = dma.done [#allocation19], 16
        $region96: #{tpu_custom_call.1} parent=63 // pred_fallthru
          _
        // Predicated region
        $region97: #{tpu_custom_call.1} parent=63 // pred_check
          %p575 = pneg %p253
        $region98: #{tpu_custom_call.1} parent=63 // pred_check_branch
          %577 = sbr.rel (%p575) target = $region100
        $region99: #{tpu_custom_call.1} parent=63 // pred_region
          %578 = dma.done [#allocation19], 16
        $region100: #{tpu_custom_call.1} parent=63 // pred_fallthru
          _
        // Predicated region
        $region101: #{tpu_custom_call.1} parent=63 // pred_check
          %p579 = pneg %p274
        $region102: #{tpu_custom_call.1} parent=63 // pred_check_branch
          %581 = sbr.rel (%p579) target = $region104
        $region103: #{tpu_custom_call.1} parent=63 // pred_region
          %582 = dma.done [#allocation22], 256
        $region104: #{tpu_custom_call.1} parent=63 // pred_fallthru
          _
        // Predicated region
        $region105: #{tpu_custom_call.1} parent=63 // pred_check
          %p583 = pneg %p295
        $region106: #{tpu_custom_call.1} parent=63 // pred_check_branch
          %585 = sbr.rel (%p583) target = $region108
        $region107: #{tpu_custom_call.1} parent=63 // pred_region
          %586 = dma.done [#allocation22], 16
        $region108: #{tpu_custom_call.1} parent=63 // pred_fallthru
          _
        %s587 = sand.u32 %s62, 1
        %s588 = scalar_lea.sflag [#allocation7], %s587
        %s589 = sand.u32 %s62, 1
        %s590 = smul.addr %s589, 8
        %s591 = scalar_lea.vmem [#allocation6], %s590
        %p592 = pneg %p75
        %p593 = pneg %p72
        %s594 = sand.u32 %s40, 1
        %s595 = scalar_lea.sflag [#allocation10], %s594
        %s596 = sand.u32 %s88, 1
        %s597 = smul.addr %s596, 8
        %s598 = scalar_lea.vmem [#allocation9], %s597
        %p599 = pneg %p101
        %p600 = pneg %p98
        %s601 = sand.u32 %s40, 1
        %s602 = scalar_lea.sflag [#allocation10], %s601
        %s603 = sand.u32 %s114, 1
        %s604 = smul.addr %s603, 8
        %s605 = scalar_lea.vmem [#allocation11], %s604
        %p606 = pneg %p127
        %p607 = pneg %p124
        %p608 = pneg %p148
        %p609 = pneg %p145
        %p610 = pneg %p169
        %p611 = pneg %p166
        %p612 = pneg %p190
        %p613 = pneg %p187
        %p614 = pneg %p211
        %p615 = pneg %p208
        %p616 = pneg %p232
        %p617 = pneg %p229
        %p618 = pneg %p253
        %p619 = pneg %p250
        %p620 = pneg %p274
        %p621 = pneg %p271
        %p622 = pneg %p295
        %p623 = pneg %p292
        %p624 = pneg %p323
        %p625 = pneg %p320
        %s626 = sand.u32 %s310, 1
        %s627 = scalar_lea.sflag [#allocation8], %s626
        %s628 = sand.u32 %s310, 1
        %s629 = smul.addr %s628, 8
        %s630 = scalar_lea.vmem [#allocation24], %s629
        %p631 = pneg %p351
        %p632 = pneg %p348
        %s633 = sand.u32 %s338, 1
        %s634 = scalar_lea.sflag [#allocation26], %s633
        %s635 = sand.u32 %s338, 1
        %s636 = smul.addr %s635, 8
        %s637 = scalar_lea.vmem [#allocation25], %s636
        %p639 = scmp.eq.s32.totalorder %s45, 0
        // Predicated region
        $region109: #{tpu_custom_call.1} parent=63 // pred_check
          %p640 = pneg %p639
        $region110: #{tpu_custom_call.1} parent=63 // pred_check_branch
          %642 = sbr.rel (%p640) target = $region112
        $region111: #{tpu_custom_call.1} parent=63 // pred_region
          %v643 = vld [vmem:[%s541] sm:$0xff]
          %v644 = vpack.c.bf16 %v643, %v643
          %v645 = vld [vmem:[%s550] sm:$0xff]
          %v646 = vpack.c.bf16 %v645, %v645
          %v647 = vld [vmem:[#allocation14] sm:$0xf]
          %v648 = vld [vmem:[#allocation14 + $0x4] sm:$0xf]
          %v649 = vld [vmem:[#allocation14 + $0x8] sm:$0xf]
          %v650 = vld [vmem:[#allocation14 + $0xc] sm:$0xf]
          %v651 = vld [vmem:[#allocation18] sm:$0x1]
          %v653 = vlaneseq
          %v654 = vshrl.u32 %v653, 7
          %v655 = vsub.s32 0, %v654
          %v656 = vrot.slane %v651, %v655
          %v662 = vunpack.c.l.b16 %v647
          %v663 = vunpack.c.l.b16 %v648
          %v664 = vunpack.c.l.b16 %v649
          %v665 = vunpack.c.l.b16 %v650
          %v666 = vpack.c.b16 %v663, %v662
          %v667 = vpack.c.b16 %v665, %v664
          %vm670 = vcmask 261120
          %v672 = vsel %vm670, %v644, 0
          %674 = vmatprep.subr.bf16.mxu0 0
          %675 = vmatpush1.bf16.msra.mxu0 %v666
          %676 = vmatprep.subr.bf16.mxu0 0
          %677 = vmatpush1.bf16.msra.mxu0 %v667
          %678 = vmatprep.subr.bf16.mxu0 0
          %679 = vmatpush1.bf16.msra.mxu0 0
          %680 = vmatprep.subr.bf16.mxu0 0
          %681 = vmatpush1.bf16.msra.mxu0 0
          %682 = vmatprep.subr.bf16.mxu0 0
          %683 = vmatpush1.bf16.msra.mxu0 0
          %684 = vmatprep.subr.bf16.mxu0 0
          %685 = vmatpush1.bf16.msra.mxu0 0
          %686 = vmatprep.subr.bf16.mxu0 0
          %687 = vmatpush1.bf16.msra.mxu0 0
          %688 = vmatprep.subr.bf16.mxu0 0
          %689 = vmatpush1.bf16.msra.mxu0 0
          %690 = vmatprep.subr.bf16.mxu0 0
          %691 = vmatpush1.bf16.msra.mxu0 0
          %692 = vmatprep.subr.bf16.mxu0 0
          %693 = vmatpush1.bf16.msra.mxu0 0
          %694 = vmatprep.subr.bf16.mxu0 0
          %695 = vmatpush1.bf16.msra.mxu0 0
          %696 = vmatprep.subr.bf16.mxu0 0
          %697 = vmatpush1.bf16.msra.mxu0 0
          %698 = vmatprep.subr.bf16.mxu0 0
          %699 = vmatpush1.bf16.msra.mxu0 0
          %700 = vmatprep.subr.bf16.mxu0 0
          %701 = vmatpush1.bf16.msra.mxu0 0
          %702 = vmatprep.subr.bf16.mxu0 0
          %703 = vmatpush1.bf16.msra.mxu0 0
          %704 = vmatprep.subr.bf16.mxu0 0
          %705 = vmatpush1.bf16.msra.mxu0 0
          %706 = vmatprep.mubr.bf16.mxu0 0
          %707 = vmatmul.mubr.bf16.gmra.mrb[0].mxu0 %v672
          %v708 = vpop.f32.mrb[0].mxu0
          %v709 = vadd.f32 %v656, %v708
          %v710 = vpop.f32.mrb[0].mxu0
          %v711 = vpop.f32.mrb[0].mxu0
          %v712 = vpop.f32.mrb[0].mxu0
          %713 = vdwg.mxu0
          %v714 = vld [vmem:[#allocation15] sm:$0xf]
          %v715 = vld [vmem:[#allocation15 + $0x4] sm:$0xf]
          %v716 = vld [vmem:[#allocation15 + $0x8] sm:$0xf]
          %v717 = vld [vmem:[#allocation15 + $0xc] sm:$0xf]
          %v718 = vld [vmem:[#allocation20] sm:$0x1]
          %v720 = vlaneseq
          %v721 = vshrl.u32 %v720, 7
          %v722 = vsub.s32 0, %v721
          %v723 = vrot.slane %v718, %v722
          %v729 = vunpack.c.l.b16 %v714
          %v730 = vunpack.c.l.b16 %v715
          %v731 = vunpack.c.l.b16 %v716
          %v732 = vunpack.c.l.b16 %v717
          %v733 = vpack.c.b16 %v730, %v729
          %v734 = vpack.c.b16 %v732, %v731
          %v738 = vsel %vm670, %v646, 0
          %740 = vmatprep.subr.bf16.mxu0 0
          %741 = vmatpush1.bf16.msra.mxu0 %v733
          %742 = vmatprep.subr.bf16.mxu0 0
          %743 = vmatpush1.bf16.msra.mxu0 %v734
          %744 = vmatprep.subr.bf16.mxu0 0
          %745 = vmatpush1.bf16.msra.mxu0 0
          %746 = vmatprep.subr.bf16.mxu0 0
          %747 = vmatpush1.bf16.msra.mxu0 0
          %748 = vmatprep.subr.bf16.mxu0 0
          %749 = vmatpush1.bf16.msra.mxu0 0
          %750 = vmatprep.subr.bf16.mxu0 0
          %751 = vmatpush1.bf16.msra.mxu0 0
          %752 = vmatprep.subr.bf16.mxu0 0
          %753 = vmatpush1.bf16.msra.mxu0 0
          %754 = vmatprep.subr.bf16.mxu0 0
          %755 = vmatpush1.bf16.msra.mxu0 0
          %756 = vmatprep.subr.bf16.mxu0 0
          %757 = vmatpush1.bf16.msra.mxu0 0
          %758 = vmatprep.subr.bf16.mxu0 0
          %759 = vmatpush1.bf16.msra.mxu0 0
          %760 = vmatprep.subr.bf16.mxu0 0
          %761 = vmatpush1.bf16.msra.mxu0 0
          %762 = vmatprep.subr.bf16.mxu0 0
          %763 = vmatpush1.bf16.msra.mxu0 0
          %764 = vmatprep.subr.bf16.mxu0 0
          %765 = vmatpush1.bf16.msra.mxu0 0
          %766 = vmatprep.subr.bf16.mxu0 0
          %767 = vmatpush1.bf16.msra.mxu0 0
          %768 = vmatprep.subr.bf16.mxu0 0
          %769 = vmatpush1.bf16.msra.mxu0 0
          %770 = vmatprep.subr.bf16.mxu0 0
          %771 = vmatpush1.bf16.msra.mxu0 0
          %772 = vmatprep.mubr.bf16.mxu0 0
          %773 = vmatmul.mubr.bf16.gmra.mrb[0].mxu0 %v738
          %v774 = vpop.f32.mrb[0].mxu0
          %v775 = vadd.f32 %v723, %v774
          %v776 = vpop.f32.mrb[0].mxu0
          %v777 = vpop.f32.mrb[0].mxu0
          %v778 = vpop.f32.mrb[0].mxu0
          %779 = vdwg.mxu0
          %v780 = vpack.c.bf16 %v709, %v709
          %v781 = vpack.c.bf16 %v775, %v775
          %vm782 = vcmask 60416
          %783 = vst.msk [vmem:[#allocation3] sm:$0xf] %vm782, %v780
          %784 = vst.msk [vmem:[#allocation4] sm:$0xf] %vm782, %v781
          %v786 = vunpack.c.l.b16 %v780
          %v787 = vpack.c.b16 %v786, %v786
          %788 = vrot.lane.b32.xlu0 %v787, 120
          %v789 = vpop.permute.xlu0 %788
          %s791 = scalar_lea.vmem [#allocation3], 4
          %792 = vst.msk [vmem:[%s791] sm:$0xf] %vm782, %v789
          %v794 = vunpack.c.l.b16 %v781
          %v795 = vpack.c.b16 %v794, %v794
          %796 = vrot.lane.b32.xlu0 %v795, 120
          %v797 = vpop.permute.xlu0 %796
          %s799 = scalar_lea.vmem [#allocation4], 4
          %800 = vst.msk [vmem:[%s799] sm:$0xf] %vm782, %v797
          %801 = vrot.lane.b32.xlu0 %v787, 112
          %v802 = vpop.permute.xlu0 %801
          %s804 = scalar_lea.vmem [#allocation3], 8
          %805 = vst.msk [vmem:[%s804] sm:$0xf] %vm782, %v802
          %806 = vrot.lane.b32.xlu0 %v795, 112
          %v807 = vpop.permute.xlu0 %806
          %s809 = scalar_lea.vmem [#allocation4], 8
          %810 = vst.msk [vmem:[%s809] sm:$0xf] %vm782, %v807
          %811 = vrot.lane.b32.xlu0 %v787, 104
          %v812 = vpop.permute.xlu0 %811
          %s814 = scalar_lea.vmem [#allocation3], 12
          %815 = vst.msk [vmem:[%s814] sm:$0xf] %vm782, %v812
          %816 = vrot.lane.b32.xlu0 %v795, 104
          %v817 = vpop.permute.xlu0 %816
          %s819 = scalar_lea.vmem [#allocation4], 12
          %820 = vst.msk [vmem:[%s819] sm:$0xf] %vm782, %v817
        $region112: #{tpu_custom_call.1} parent=63 // pred_fallthru
          _
        %v821 = vld [vmem:[%s532] sm:$0xff]
        %v822 = vpack.c.bf16 %v821, %v821
        %v823 = vld [vmem:[#allocation12] sm:$0xf]
        %v824 = vld [vmem:[#allocation12 + $0x4] sm:$0xf]
        %v825 = vld [vmem:[#allocation12 + $0x8] sm:$0xf]
        %v826 = vld [vmem:[#allocation12 + $0xc] sm:$0xf]
        %v827 = vld [vmem:[#allocation17] sm:$0x1]
        %v829 = vlaneseq
        %v830 = vshrl.u32 %v829, 7
        %v831 = vsub.s32 0, %v830
        %v832 = vrot.slane %v827, %v831
        %v838 = vunpack.c.l.b16 %v823
        %v839 = vunpack.c.l.b16 %v824
        %v840 = vunpack.c.l.b16 %v825
        %v841 = vunpack.c.l.b16 %v826
        %v842 = vpack.c.b16 %v839, %v838
        %v843 = vpack.c.b16 %v841, %v840
        %vm846 = vcmask 261120
        %v848 = vsel %vm846, %v822, 0
        %850 = vmatprep.subr.bf16.mxu0 0
        %851 = vmatpush1.bf16.msra.mxu0 %v842
        %852 = vmatprep.subr.bf16.mxu0 0
        %853 = vmatpush1.bf16.msra.mxu0 %v843
        %854 = vmatprep.subr.bf16.mxu0 0
        %855 = vmatpush1.bf16.msra.mxu0 0
        %856 = vmatprep.subr.bf16.mxu0 0
        %857 = vmatpush1.bf16.msra.mxu0 0
        %858 = vmatprep.subr.bf16.mxu0 0
        %859 = vmatpush1.bf16.msra.mxu0 0
        %860 = vmatprep.subr.bf16.mxu0 0
        %861 = vmatpush1.bf16.msra.mxu0 0
        %862 = vmatprep.subr.bf16.mxu0 0
        %863 = vmatpush1.bf16.msra.mxu0 0
        %864 = vmatprep.subr.bf16.mxu0 0
        %865 = vmatpush1.bf16.msra.mxu0 0
        %866 = vmatprep.subr.bf16.mxu0 0
        %867 = vmatpush1.bf16.msra.mxu0 0
        %868 = vmatprep.subr.bf16.mxu0 0
        %869 = vmatpush1.bf16.msra.mxu0 0
        %870 = vmatprep.subr.bf16.mxu0 0
        %871 = vmatpush1.bf16.msra.mxu0 0
        %872 = vmatprep.subr.bf16.mxu0 0
        %873 = vmatpush1.bf16.msra.mxu0 0
        %874 = vmatprep.subr.bf16.mxu0 0
        %875 = vmatpush1.bf16.msra.mxu0 0
        %876 = vmatprep.subr.bf16.mxu0 0
        %877 = vmatpush1.bf16.msra.mxu0 0
        %878 = vmatprep.subr.bf16.mxu0 0
        %879 = vmatpush1.bf16.msra.mxu0 0
        %880 = vmatprep.subr.bf16.mxu0 0
        %881 = vmatpush1.bf16.msra.mxu0 0
        %882 = vmatprep.mubr.bf16.mxu0 0
        %883 = vmatmul.mubr.bf16.gmra.mrb[0].mxu0 %v848
        %v884 = vpop.f32.mrb[0].mxu0
        %v885 = vadd.f32 %v832, %v884
        %v886 = vpop.f32.mrb[0].mxu0
        %v887 = vpop.f32.mrb[0].mxu0
        %v888 = vpop.f32.mrb[0].mxu0
        %889 = vdwg.mxu0
        %v890 = vpack.c.bf16 %v885, %v885
        %vm891 = vcmask 60416
        %892 = vst.msk [vmem:[#allocation2] sm:$0xf] %vm891, %v890
        %v894 = vunpack.c.l.b16 %v890
        %v895 = vpack.c.b16 %v894, %v894
        %896 = vrot.lane.b32.xlu0 %v895, 120
        %v897 = vpop.permute.xlu0 %896
        %s899 = scalar_lea.vmem [#allocation2], 4
        %900 = vst.msk [vmem:[%s899] sm:$0xf] %vm891, %v897
        %901 = vrot.lane.b32.xlu0 %v895, 112
        %v902 = vpop.permute.xlu0 %901
        %s904 = scalar_lea.vmem [#allocation2], 8
        %905 = vst.msk [vmem:[%s904] sm:$0xf] %vm891, %v902
        %906 = vrot.lane.b32.xlu0 %v895, 104
        %v907 = vpop.permute.xlu0 %906
        %s909 = scalar_lea.vmem [#allocation2], 12
        %910 = vst.msk [vmem:[%s909] sm:$0xf] %vm891, %v907
        %v911 = vld [vmem:[#allocation2] sm:$0xf]
        %v912 = vld [vmem:[#allocation2 + $0x4] sm:$0xf]
        %v913 = vld [vmem:[#allocation2 + $0x8] sm:$0xf]
        %v914 = vld [vmem:[#allocation2 + $0xc] sm:$0xf]
        %v915 = vld [vmem:[#allocation3] sm:$0xf]
        %v916 = vld [vmem:[#allocation3 + $0x4] sm:$0xf]
        %v917 = vld [vmem:[#allocation3 + $0x8] sm:$0xf]
        %v918 = vld [vmem:[#allocation3 + $0xc] sm:$0xf]
        %v919 = vld [vmem:[#allocation4] sm:$0xf]
        %v920 = vld [vmem:[#allocation4 + $0x4] sm:$0xf]
        %v921 = vld [vmem:[#allocation4 + $0x8] sm:$0xf]
        %v922 = vld [vmem:[#allocation4 + $0xc] sm:$0xf]
        %vm923 = vcmask 64512
        %v925 = vsel %vm923, %v911, 0
        %v928 = vsel %vm923, %v915, 0
        %930 = vmatprep.subr.bf16.mxu0 0
        %931 = vmatpush1.bf16.xpose.msra.mxu0 %v928
        %932 = vmatprep.subr.bf16.mxu0 0
        %933 = vmatpush1.bf16.xpose.msra.mxu0 0
        %934 = vmatprep.subr.bf16.mxu0 0
        %935 = vmatpush1.bf16.xpose.msra.mxu0 0
        %936 = vmatprep.subr.bf16.mxu0 0
        %937 = vmatpush1.bf16.xpose.msra.mxu0 0
        %938 = vmatprep.subr.bf16.mxu0 0
        %939 = vmatpush1.bf16.xpose.msra.mxu0 0
        %940 = vmatprep.subr.bf16.mxu0 0
        %941 = vmatpush1.bf16.xpose.msra.mxu0 0
        %942 = vmatprep.subr.bf16.mxu0 0
        %943 = vmatpush1.bf16.xpose.msra.mxu0 0
        %944 = vmatprep.subr.bf16.mxu0 0
        %945 = vmatpush1.bf16.xpose.msra.mxu0 0
        %946 = vmatprep.subr.bf16.mxu0 0
        %947 = vmatpush1.bf16.xpose.msra.mxu0 0
        %948 = vmatprep.subr.bf16.mxu0 0
        %949 = vmatpush1.bf16.xpose.msra.mxu0 0
        %950 = vmatprep.subr.bf16.mxu0 0
        %951 = vmatpush1.bf16.xpose.msra.mxu0 0
        %952 = vmatprep.subr.bf16.mxu0 0
        %953 = vmatpush1.bf16.xpose.msra.mxu0 0
        %954 = vmatprep.subr.bf16.mxu0 0
        %955 = vmatpush1.bf16.xpose.msra.mxu0 0
        %956 = vmatprep.subr.bf16.mxu0 0
        %957 = vmatpush1.bf16.xpose.msra.mxu0 0
        %958 = vmatprep.subr.bf16.mxu0 0
        %959 = vmatpush1.bf16.xpose.msra.mxu0 0
        %960 = vmatprep.subr.bf16.mxu0 0
        %961 = vmatpush1.bf16.xpose.msra.mxu0 0
        %962 = vmatprep.mubr.bf16.mxu0 0
        %963 = vmatmul.mubr.bf16.gmra.mrb[0].mxu0 %v925
        %v964 = vpop.f32.mrb[0].mxu0
        %v965 = vadd.f32 0.0, %v964
        %v966 = vpop.f32.mrb[0].mxu0
        %v967 = vpop.f32.mrb[0].mxu0
        %v968 = vpop.f32.mrb[0].mxu0
        %969 = vdwg.mxu0
        %v971 = vsel %vm923, %v912, 0
        %v974 = vsel %vm923, %v916, 0
        %976 = vmatprep.subr.bf16.mxu0 0
        %977 = vmatpush1.bf16.xpose.msra.mxu0 %v974
        %978 = vmatprep.subr.bf16.mxu0 0
        %979 = vmatpush1.bf16.xpose.msra.mxu0 0
        %980 = vmatprep.subr.bf16.mxu0 0
        %981 = vmatpush1.bf16.xpose.msra.mxu0 0
        %982 = vmatprep.subr.bf16.mxu0 0
        %983 = vmatpush1.bf16.xpose.msra.mxu0 0
        %984 = vmatprep.subr.bf16.mxu0 0
        %985 = vmatpush1.bf16.xpose.msra.mxu0 0
        %986 = vmatprep.subr.bf16.mxu0 0
        %987 = vmatpush1.bf16.xpose.msra.mxu0 0
        %988 = vmatprep.subr.bf16.mxu0 0
        %989 = vmatpush1.bf16.xpose.msra.mxu0 0
        %990 = vmatprep.subr.bf16.mxu0 0
        %991 = vmatpush1.bf16.xpose.msra.mxu0 0
        %992 = vmatprep.subr.bf16.mxu0 0
        %993 = vmatpush1.bf16.xpose.msra.mxu0 0
        %994 = vmatprep.subr.bf16.mxu0 0
        %995 = vmatpush1.bf16.xpose.msra.mxu0 0
        %996 = vmatprep.subr.bf16.mxu0 0
        %997 = vmatpush1.bf16.xpose.msra.mxu0 0
        %998 = vmatprep.subr.bf16.mxu0 0
        %999 = vmatpush1.bf16.xpose.msra.mxu0 0
        %1000 = vmatprep.subr.bf16.mxu0 0
        %1001 = vmatpush1.bf16.xpose.msra.mxu0 0
        %1002 = vmatprep.subr.bf16.mxu0 0
        %1003 = vmatpush1.bf16.xpose.msra.mxu0 0
        %1004 = vmatprep.subr.bf16.mxu0 0
        %1005 = vmatpush1.bf16.xpose.msra.mxu0 0
        %1006 = vmatprep.subr.bf16.mxu0 0
        %1007 = vmatpush1.bf16.xpose.msra.mxu0 0
        %1008 = vmatprep.mubr.bf16.mxu0 0
        %1009 = vmatmul.mubr.bf16.gmra.mrb[0].mxu0 %v971
        %v1010 = vpop.f32.mrb[0].mxu0
        %v1011 = vadd.f32 0.0, %v1010
        %v1012 = vpop.f32.mrb[0].mxu0
        %v1013 = vpop.f32.mrb[0].mxu0
        %v1014 = vpop.f32.mrb[0].mxu0
        %1015 = vdwg.mxu0
        %v1017 = vsel %vm923, %v913, 0
        %v1020 = vsel %vm923, %v917, 0
        %1022 = vmatprep.subr.bf16.mxu0 0
        %1023 = vmatpush1.bf16.xpose.msra.mxu0 %v1020
        %1024 = vmatprep.subr.bf16.mxu0 0
        %1025 = vmatpush1.bf16.xpose.msra.mxu0 0
        %1026 = vmatprep.subr.bf16.mxu0 0
        %1027 = vmatpush1.bf16.xpose.msra.mxu0 0
        %1028 = vmatprep.subr.bf16.mxu0 0
        %1029 = vmatpush1.bf16.xpose.msra.mxu0 0
        %1030 = vmatprep.subr.bf16.mxu0 0
        %1031 = vmatpush1.bf16.xpose.msra.mxu0 0
        %1032 = vmatprep.subr.bf16.mxu0 0
        %1033 = vmatpush1.bf16.xpose.msra.mxu0 0
        %1034 = vmatprep.subr.bf16.mxu0 0
        %1035 = vmatpush1.bf16.xpose.msra.mxu0 0
        %1036 = vmatprep.subr.bf16.mxu0 0
        %1037 = vmatpush1.bf16.xpose.msra.mxu0 0
        %1038 = vmatprep.subr.bf16.mxu0 0
        %1039 = vmatpush1.bf16.xpose.msra.mxu0 0
        %1040 = vmatprep.subr.bf16.mxu0 0
        %1041 = vmatpush1.bf16.xpose.msra.mxu0 0
        %1042 = vmatprep.subr.bf16.mxu0 0
        %1043 = vmatpush1.bf16.xpose.msra.mxu0 0
        %1044 = vmatprep.subr.bf16.mxu0 0
        %1045 = vmatpush1.bf16.xpose.msra.mxu0 0
        %1046 = vmatprep.subr.bf16.mxu0 0
        %1047 = vmatpush1.bf16.xpose.msra.mxu0 0
        %1048 = vmatprep.subr.bf16.mxu0 0
        %1049 = vmatpush1.bf16.xpose.msra.mxu0 0
        %1050 = vmatprep.subr.bf16.mxu0 0
        %1051 = vmatpush1.bf16.xpose.msra.mxu0 0
        %1052 = vmatprep.subr.bf16.mxu0 0
        %1053 = vmatpush1.bf16.xpose.msra.mxu0 0
        %1054 = vmatprep.mubr.bf16.mxu0 0
        %1055 = vmatmul.mubr.bf16.gmra.mrb[0].mxu0 %v1017
        %v1056 = vpop.f32.mrb[0].mxu0
        %v1057 = vadd.f32 0.0, %v1056
        %v1058 = vpop.f32.mrb[0].mxu0
        %v1059 = vpop.f32.mrb[0].mxu0
        %v1060 = vpop.f32.mrb[0].mxu0
        %1061 = vdwg.mxu0
        %v1063 = vsel %vm923, %v914, 0
        %v1066 = vsel %vm923, %v918, 0
        %1068 = vmatprep.subr.bf16.mxu0 0
        %1069 = vmatpush1.bf16.xpose.msra.mxu0 %v1066
        %1070 = vmatprep.subr.bf16.mxu0 0
        %1071 = vmatpush1.bf16.xpose.msra.mxu0 0
        %1072 = vmatprep.subr.bf16.mxu0 0
        %1073 = vmatpush1.bf16.xpose.msra.mxu0 0
        %1074 = vmatprep.subr.bf16.mxu0 0
        %1075 = vmatpush1.bf16.xpose.msra.mxu0 0
        %1076 = vmatprep.subr.bf16.mxu0 0
        %1077 = vmatpush1.bf16.xpose.msra.mxu0 0
        %1078 = vmatprep.subr.bf16.mxu0 0
        %1079 = vmatpush1.bf16.xpose.msra.mxu0 0
        %1080 = vmatprep.subr.bf16.mxu0 0
        %1081 = vmatpush1.bf16.xpose.msra.mxu0 0
        %1082 = vmatprep.subr.bf16.mxu0 0
        %1083 = vmatpush1.bf16.xpose.msra.mxu0 0
        %1084 = vmatprep.subr.bf16.mxu0 0
        %1085 = vmatpush1.bf16.xpose.msra.mxu0 0
        %1086 = vmatprep.subr.bf16.mxu0 0
        %1087 = vmatpush1.bf16.xpose.msra.mxu0 0
        %1088 = vmatprep.subr.bf16.mxu0 0
        %1089 = vmatpush1.bf16.xpose.msra.mxu0 0
        %1090 = vmatprep.subr.bf16.mxu0 0
        %1091 = vmatpush1.bf16.xpose.msra.mxu0 0
        %1092 = vmatprep.subr.bf16.mxu0 0
        %1093 = vmatpush1.bf16.xpose.msra.mxu0 0
        %1094 = vmatprep.subr.bf16.mxu0 0
        %1095 = vmatpush1.bf16.xpose.msra.mxu0 0
        %1096 = vmatprep.subr.bf16.mxu0 0
        %1097 = vmatpush1.bf16.xpose.msra.mxu0 0
        %1098 = vmatprep.subr.bf16.mxu0 0
        %1099 = vmatpush1.bf16.xpose.msra.mxu0 0
        %1100 = vmatprep.mubr.bf16.mxu0 0
        %1101 = vmatmul.mubr.bf16.gmra.mrb[0].mxu0 %v1063
        %v1102 = vpop.f32.mrb[0].mxu0
        %v1103 = vadd.f32 0.0, %v1102
        %v1104 = vpop.f32.mrb[0].mxu0
        %v1105 = vpop.f32.mrb[0].mxu0
        %v1106 = vpop.f32.mrb[0].mxu0
        %1107 = vdwg.mxu0
        %v1108 = vsel %vm923, %v965, -inf
        %1109 = vmax.xlane.f32.xlu0 %v1108
        %v1110 = vpop.xlane.xlu0 %1109
        %v1111 = vsel %vm923, %v1011, -inf
        %1112 = vmax.xlane.f32.xlu0 %v1111
        %v1113 = vpop.xlane.xlu0 %1112
        %v1114 = vsel %vm923, %v1057, -inf
        %1115 = vmax.xlane.f32.xlu0 %v1114
        %v1116 = vpop.xlane.xlu0 %1115
        %v1117 = vsel %vm923, %v1103, -inf
        %1118 = vmax.xlane.f32.xlu0 %v1117
        %v1119 = vpop.xlane.xlu0 %1118
        %v1120 = vsub.f32 %v965, %v1110
        %v1121 = vsub.f32 %v1011, %v1113
        %v1122 = vsub.f32 %v1057, %v1116
        %v1123 = vsub.f32 %v1103, %v1119
        %v1124 = vmul.f32 %v1120, 1.442695
        %v1125 = vpow.pop %v1124
        %v1126 = vmul.f32 %v1121, 1.442695
        %v1127 = vpow.pop %v1126
        %v1128 = vmul.f32 %v1122, 1.442695
        %v1129 = vpow.pop %v1128
        %v1130 = vmul.f32 %v1123, 1.442695
        %v1131 = vpow.pop %v1130
        %v1132 = vsel %vm923, %v1125, 0.0
        %1133 = vadd.xlane.f32.xlu0 %v1132
        %v1134 = vpop.xlane.xlu0 %1133
        %v1135 = vsel %vm923, %v1127, 0.0
        %1136 = vadd.xlane.f32.xlu0 %v1135
        %v1137 = vpop.xlane.xlu0 %1136
        %v1138 = vsel %vm923, %v1129, 0.0
        %1139 = vadd.xlane.f32.xlu0 %v1138
        %v1140 = vpop.xlane.xlu0 %1139
        %v1141 = vsel %vm923, %v1131, 0.0
        %1142 = vadd.xlane.f32.xlu0 %v1141
        %v1143 = vpop.xlane.xlu0 %1142
        %v1144 = vrcp.pop %v1134
        %v1145 = vmul.f32 %v1125, %v1144
        %v1146 = vrcp.pop %v1137
        %v1147 = vmul.f32 %v1127, %v1146
        %v1148 = vrcp.pop %v1140
        %v1149 = vmul.f32 %v1129, %v1148
        %v1150 = vrcp.pop %v1143
        %v1151 = vmul.f32 %v1131, %v1150
        %v1152 = vpack.c.bf16 %v1145, %v1145
        %v1153 = vpack.c.bf16 %v1147, %v1147
        %v1154 = vpack.c.bf16 %v1149, %v1149
        %v1155 = vpack.c.bf16 %v1151, %v1151
        %v1157 = vsel %vm923, %v1152, 0
        %vm1159 = vcmask 1043456
        %v1161 = vsel %vm1159, %v919, 0
        %1163 = vmatprep.subr.bf16.mxu0 0
        %1164 = vmatpush1.bf16.msra.mxu0 %v1161
        %1165 = vmatprep.subr.bf16.mxu0 0
        %1166 = vmatpush1.bf16.msra.mxu0 0
        %1167 = vmatprep.subr.bf16.mxu0 0
        %1168 = vmatpush1.bf16.msra.mxu0 0
        %1169 = vmatprep.subr.bf16.mxu0 0
        %1170 = vmatpush1.bf16.msra.mxu0 0
        %1171 = vmatprep.subr.bf16.mxu0 0
        %1172 = vmatpush1.bf16.msra.mxu0 0
        %1173 = vmatprep.subr.bf16.mxu0 0
        %1174 = vmatpush1.bf16.msra.mxu0 0
        %1175 = vmatprep.subr.bf16.mxu0 0
        %1176 = vmatpush1.bf16.msra.mxu0 0
        %1177 = vmatprep.subr.bf16.mxu0 0
        %1178 = vmatpush1.bf16.msra.mxu0 0
        %1179 = vmatprep.subr.bf16.mxu0 0
        %1180 = vmatpush1.bf16.msra.mxu0 0
        %1181 = vmatprep.subr.bf16.mxu0 0
        %1182 = vmatpush1.bf16.msra.mxu0 0
        %1183 = vmatprep.subr.bf16.mxu0 0
        %1184 = vmatpush1.bf16.msra.mxu0 0
        %1185 = vmatprep.subr.bf16.mxu0 0
        %1186 = vmatpush1.bf16.msra.mxu0 0
        %1187 = vmatprep.subr.bf16.mxu0 0
        %1188 = vmatpush1.bf16.msra.mxu0 0
        %1189 = vmatprep.subr.bf16.mxu0 0
        %1190 = vmatpush1.bf16.msra.mxu0 0
        %1191 = vmatprep.subr.bf16.mxu0 0
        %1192 = vmatpush1.bf16.msra.mxu0 0
        %1193 = vmatprep.subr.bf16.mxu0 0
        %1194 = vmatpush1.bf16.msra.mxu0 0
        %1195 = vmatprep.mubr.bf16.mxu0 0
        %1196 = vmatmul.mubr.bf16.gmra.mrb[0].mxu0 %v1157
        %v1197 = vpop.f32.mrb[0].mxu0
        %v1198 = vadd.f32 0.0, %v1197
        %v1199 = vpop.f32.mrb[0].mxu0
        %v1200 = vpop.f32.mrb[0].mxu0
        %v1201 = vpop.f32.mrb[0].mxu0
        %1202 = vdwg.mxu0
        %v1204 = vsel %vm923, %v1153, 0
        %v1207 = vsel %vm1159, %v920, 0
        %1209 = vmatprep.subr.bf16.mxu0 0
        %1210 = vmatpush1.bf16.msra.mxu0 %v1207
        %1211 = vmatprep.subr.bf16.mxu0 0
        %1212 = vmatpush1.bf16.msra.mxu0 0
        %1213 = vmatprep.subr.bf16.mxu0 0
        %1214 = vmatpush1.bf16.msra.mxu0 0
        %1215 = vmatprep.subr.bf16.mxu0 0
        %1216 = vmatpush1.bf16.msra.mxu0 0
        %1217 = vmatprep.subr.bf16.mxu0 0
        %1218 = vmatpush1.bf16.msra.mxu0 0
        %1219 = vmatprep.subr.bf16.mxu0 0
        %1220 = vmatpush1.bf16.msra.mxu0 0
        %1221 = vmatprep.subr.bf16.mxu0 0
        %1222 = vmatpush1.bf16.msra.mxu0 0
        %1223 = vmatprep.subr.bf16.mxu0 0
        %1224 = vmatpush1.bf16.msra.mxu0 0
        %1225 = vmatprep.subr.bf16.mxu0 0
        %1226 = vmatpush1.bf16.msra.mxu0 0
        %1227 = vmatprep.subr.bf16.mxu0 0
        %1228 = vmatpush1.bf16.msra.mxu0 0
        %1229 = vmatprep.subr.bf16.mxu0 0
        %1230 = vmatpush1.bf16.msra.mxu0 0
        %1231 = vmatprep.subr.bf16.mxu0 0
        %1232 = vmatpush1.bf16.msra.mxu0 0
        %1233 = vmatprep.subr.bf16.mxu0 0
        %1234 = vmatpush1.bf16.msra.mxu0 0
        %1235 = vmatprep.subr.bf16.mxu0 0
        %1236 = vmatpush1.bf16.msra.mxu0 0
        %1237 = vmatprep.subr.bf16.mxu0 0
        %1238 = vmatpush1.bf16.msra.mxu0 0
        %1239 = vmatprep.subr.bf16.mxu0 0
        %1240 = vmatpush1.bf16.msra.mxu0 0
        %1241 = vmatprep.mubr.bf16.mxu0 0
        %1242 = vmatmul.mubr.bf16.gmra.mrb[0].mxu0 %v1204
        %v1243 = vpop.f32.mrb[0].mxu0
        %v1244 = vadd.f32 0.0, %v1243
        %v1245 = vpop.f32.mrb[0].mxu0
        %v1246 = vpop.f32.mrb[0].mxu0
        %v1247 = vpop.f32.mrb[0].mxu0
        %1248 = vdwg.mxu0
        %v1250 = vsel %vm923, %v1154, 0
        %v1253 = vsel %vm1159, %v921, 0
        %1255 = vmatprep.subr.bf16.mxu0 0
        %1256 = vmatpush1.bf16.msra.mxu0 %v1253
        %1257 = vmatprep.subr.bf16.mxu0 0
        %1258 = vmatpush1.bf16.msra.mxu0 0
        %1259 = vmatprep.subr.bf16.mxu0 0
        %1260 = vmatpush1.bf16.msra.mxu0 0
        %1261 = vmatprep.subr.bf16.mxu0 0
        %1262 = vmatpush1.bf16.msra.mxu0 0
        %1263 = vmatprep.subr.bf16.mxu0 0
        %1264 = vmatpush1.bf16.msra.mxu0 0
        %1265 = vmatprep.subr.bf16.mxu0 0
        %1266 = vmatpush1.bf16.msra.mxu0 0
        %1267 = vmatprep.subr.bf16.mxu0 0
        %1268 = vmatpush1.bf16.msra.mxu0 0
        %1269 = vmatprep.subr.bf16.mxu0 0
        %1270 = vmatpush1.bf16.msra.mxu0 0
        %1271 = vmatprep.subr.bf16.mxu0 0
        %1272 = vmatpush1.bf16.msra.mxu0 0
        %1273 = vmatprep.subr.bf16.mxu0 0
        %1274 = vmatpush1.bf16.msra.mxu0 0
        %1275 = vmatprep.subr.bf16.mxu0 0
        %1276 = vmatpush1.bf16.msra.mxu0 0
        %1277 = vmatprep.subr.bf16.mxu0 0
        %1278 = vmatpush1.bf16.msra.mxu0 0
        %1279 = vmatprep.subr.bf16.mxu0 0
        %1280 = vmatpush1.bf16.msra.mxu0 0
        %1281 = vmatprep.subr.bf16.mxu0 0
        %1282 = vmatpush1.bf16.msra.mxu0 0
        %1283 = vmatprep.subr.bf16.mxu0 0
        %1284 = vmatpush1.bf16.msra.mxu0 0
        %1285 = vmatprep.subr.bf16.mxu0 0
        %1286 = vmatpush1.bf16.msra.mxu0 0
        %1287 = vmatprep.mubr.bf16.mxu0 0
        %1288 = vmatmul.mubr.bf16.gmra.mrb[0].mxu0 %v1250
        %v1289 = vpop.f32.mrb[0].mxu0
        %v1290 = vadd.f32 0.0, %v1289
        %v1291 = vpop.f32.mrb[0].mxu0
        %v1292 = vpop.f32.mrb[0].mxu0
        %v1293 = vpop.f32.mrb[0].mxu0
        %1294 = vdwg.mxu0
        %v1296 = vsel %vm923, %v1155, 0
        %v1299 = vsel %vm1159, %v922, 0
        %1301 = vmatprep.subr.bf16.mxu0 0
        %1302 = vmatpush1.bf16.msra.mxu0 %v1299
        %1303 = vmatprep.subr.bf16.mxu0 0
        %1304 = vmatpush1.bf16.msra.mxu0 0
        %1305 = vmatprep.subr.bf16.mxu0 0
        %1306 = vmatpush1.bf16.msra.mxu0 0
        %1307 = vmatprep.subr.bf16.mxu0 0
        %1308 = vmatpush1.bf16.msra.mxu0 0
        %1309 = vmatprep.subr.bf16.mxu0 0
        %1310 = vmatpush1.bf16.msra.mxu0 0
        %1311 = vmatprep.subr.bf16.mxu0 0
        %1312 = vmatpush1.bf16.msra.mxu0 0
        %1313 = vmatprep.subr.bf16.mxu0 0
        %1314 = vmatpush1.bf16.msra.mxu0 0
        %1315 = vmatprep.subr.bf16.mxu0 0
        %1316 = vmatpush1.bf16.msra.mxu0 0
        %1317 = vmatprep.subr.bf16.mxu0 0
        %1318 = vmatpush1.bf16.msra.mxu0 0
        %1319 = vmatprep.subr.bf16.mxu0 0
        %1320 = vmatpush1.bf16.msra.mxu0 0
        %1321 = vmatprep.subr.bf16.mxu0 0
        %1322 = vmatpush1.bf16.msra.mxu0 0
        %1323 = vmatprep.subr.bf16.mxu0 0
        %1324 = vmatpush1.bf16.msra.mxu0 0
        %1325 = vmatprep.subr.bf16.mxu0 0
        %1326 = vmatpush1.bf16.msra.mxu0 0
        %1327 = vmatprep.subr.bf16.mxu0 0
        %1328 = vmatpush1.bf16.msra.mxu0 0
        %1329 = vmatprep.subr.bf16.mxu0 0
        %1330 = vmatpush1.bf16.msra.mxu0 0
        %1331 = vmatprep.subr.bf16.mxu0 0
        %1332 = vmatpush1.bf16.msra.mxu0 0
        %1333 = vmatprep.mubr.bf16.mxu0 0
        %1334 = vmatmul.mubr.bf16.gmra.mrb[0].mxu0 %v1296
        %v1335 = vpop.f32.mrb[0].mxu0
        %v1336 = vadd.f32 0.0, %v1335
        %v1337 = vpop.f32.mrb[0].mxu0
        %v1338 = vpop.f32.mrb[0].mxu0
        %v1339 = vpop.f32.mrb[0].mxu0
        %1340 = vdwg.mxu0
        %v1341 = vsel %vm923, %v1145, 0.0
        %v1342 = vsel %vm923, %v1147, 0.0
        %v1343 = vadd.f32 %v1341, %v1342
        %v1344 = vsel %vm923, %v1149, 0.0
        %v1345 = vadd.f32 %v1343, %v1344
        %v1346 = vsel %vm923, %v1151, 0.0
        %v1347 = vadd.f32 %v1345, %v1346
        %v1348 = vpack.c.bf16 %v1198, %v1198
        %1349 = vst.msk [vmem:[#allocation5] sm:$0xf] %vm891, %v1348
        %v1350 = vpack.c.bf16 %v1244, %v1244
        %v1352 = vunpack.c.l.b16 %v1350
        %v1353 = vpack.c.b16 %v1352, %v1352
        %1354 = vrot.lane.b32.xlu0 %v1353, 8
        %v1355 = vpop.permute.xlu0 %1354
        %vm1357 = vcmask 126016
        %1358 = vst.msk [vmem:[#allocation5] sm:$0xf] %vm1357, %v1355
        %v1359 = vpack.c.bf16 %v1290, %v1290
        %v1361 = vunpack.c.l.b16 %v1359
        %v1362 = vpack.c.b16 %v1361, %v1361
        %1363 = vrot.lane.b32.xlu0 %v1362, 16
        %v1364 = vpop.permute.xlu0 %1363
        %vm1366 = vcmask 191616
        %1367 = vst.msk [vmem:[#allocation5] sm:$0xf] %vm1366, %v1364
        %v1368 = vpack.c.bf16 %v1336, %v1336
        %v1370 = vunpack.c.l.b16 %v1368
        %v1371 = vpack.c.b16 %v1370, %v1370
        %1372 = vrot.lane.b32.xlu0 %v1371, 24
        %v1373 = vpop.permute.xlu0 %1372
        %vm1375 = vcmask 257216
        %1376 = vst.msk [vmem:[#allocation5] sm:$0xf] %vm1375, %v1373
        %v1377 = vld [vmem:[#allocation5] sm:$0xf]
        %v1378 = vld [vmem:[#allocation21] sm:$0xf]
        %v1379 = vld [vmem:[#allocation21 + $0x4] sm:$0xf]
        %v1380 = vld [vmem:[#allocation21 + $0x8] sm:$0xf]
        %v1381 = vld [vmem:[#allocation21 + $0xc] sm:$0xf]
        %v1382 = vld [vmem:[#allocation23] sm:$0x1]
        %v1384 = vlaneseq
        %v1385 = vshrl.u32 %v1384, 7
        %v1386 = vsub.s32 0, %v1385
        %v1387 = vrot.slane %v1382, %v1386
        %v1393 = vunpack.c.l.b16 %v1378
        %v1394 = vunpack.c.l.b16 %v1379
        %v1395 = vunpack.c.l.b16 %v1380
        %v1396 = vunpack.c.l.b16 %v1381
        %v1397 = vpack.c.b16 %v1394, %v1393
        %v1398 = vpack.c.b16 %v1396, %v1395
        %v1402 = vsel %vm846, %v1377, 0
        %1404 = vmatprep.subr.bf16.mxu0 0
        %1405 = vmatpush1.bf16.msra.mxu0 %v1397
        %1406 = vmatprep.subr.bf16.mxu0 0
        %1407 = vmatpush1.bf16.msra.mxu0 %v1398
        %1408 = vmatprep.subr.bf16.mxu0 0
        %1409 = vmatpush1.bf16.msra.mxu0 0
        %1410 = vmatprep.subr.bf16.mxu0 0
        %1411 = vmatpush1.bf16.msra.mxu0 0
        %1412 = vmatprep.subr.bf16.mxu0 0
        %1413 = vmatpush1.bf16.msra.mxu0 0
        %1414 = vmatprep.subr.bf16.mxu0 0
        %1415 = vmatpush1.bf16.msra.mxu0 0
        %1416 = vmatprep.subr.bf16.mxu0 0
        %1417 = vmatpush1.bf16.msra.mxu0 0
        %1418 = vmatprep.subr.bf16.mxu0 0
        %1419 = vmatpush1.bf16.msra.mxu0 0
        %1420 = vmatprep.subr.bf16.mxu0 0
        %1421 = vmatpush1.bf16.msra.mxu0 0
        %1422 = vmatprep.subr.bf16.mxu0 0
        %1423 = vmatpush1.bf16.msra.mxu0 0
        %1424 = vmatprep.subr.bf16.mxu0 0
        %1425 = vmatpush1.bf16.msra.mxu0 0
        %1426 = vmatprep.subr.bf16.mxu0 0
        %1427 = vmatpush1.bf16.msra.mxu0 0
        %1428 = vmatprep.subr.bf16.mxu0 0
        %1429 = vmatpush1.bf16.msra.mxu0 0
        %1430 = vmatprep.subr.bf16.mxu0 0
        %1431 = vmatpush1.bf16.msra.mxu0 0
        %1432 = vmatprep.subr.bf16.mxu0 0
        %1433 = vmatpush1.bf16.msra.mxu0 0
        %1434 = vmatprep.subr.bf16.mxu0 0
        %1435 = vmatpush1.bf16.msra.mxu0 0
        %1436 = vmatprep.mubr.bf16.mxu0 0
        %1437 = vmatmul.mubr.bf16.gmra.mrb[0].mxu0 %v1402
        %v1438 = vpop.f32.mrb[0].mxu0
        %v1439 = vadd.f32 %v1387, %v1438
        %v1440 = vpop.f32.mrb[0].mxu0
        %v1441 = vpop.f32.mrb[0].mxu0
        %v1442 = vpop.f32.mrb[0].mxu0
        %1443 = vdwg.mxu0
        %1444 = vst.msk [vmem:[%s630] sm:$0xff] %vm846, %v1439
        %v1445 = vmul.f32 %v1347, 0.25
        %1446 = vst.msk [vmem:[%s637] sm:$0xff] %vm923, %v1445
        %s1447 = sand.u32 %s310, 1
        %s1448 = scalar_lea.sflag [#allocation8], %s1447
        %s1449 = sand.u32 %s310, 1
        %s1450 = smul.addr %s1449, 8
        %s1451 = scalar_lea.vmem [#allocation24], %s1450
        %s1452 = sand.u32 %s338, 1
        %s1453 = scalar_lea.sflag [#allocation26], %s1452
        %s1454 = sand.u32 %s338, 1
        %s1455 = smul.addr %s1454, 8
        %s1456 = scalar_lea.vmem [#allocation25], %s1455
        // Predicated region
        $region113: #{tpu_custom_call.1} parent=63 // pred_check
          %p1457 = pneg %p320
        $region114: #{tpu_custom_call.1} parent=63 // pred_check_branch
          %1459 = sbr.rel (%p1457) target = $region116
        $region115: #{tpu_custom_call.1} parent=63 // pred_region
          %s1461 = ssub.s32 128, 128
          %1462 = vsyncadd %s1448, %s1461
          %s1463 = sadd.s32 %s45, %s44
          %s1464 = smul.addr %s1463, 128
          %s1465 = scalar_lea.hbm %s11, %s1464
          %s1467 = sshll.u32 %s1451, 4
          %s1468 = int_to_ptr.vmem [resolvable:$true] %s1467
          %1470 = dma.vmem_to_hbm [thread:$0]  %s1468, 128, %s1465, %s1448
        $region116: #{tpu_custom_call.1} parent=63 // pred_fallthru
          _
        // Predicated region
        $region117: #{tpu_custom_call.1} parent=63 // pred_check
          %p1471 = pneg %p348
        $region118: #{tpu_custom_call.1} parent=63 // pred_check_branch
          %1473 = sbr.rel (%p1471) target = $region120
        $region119: #{tpu_custom_call.1} parent=63 // pred_region
          %s1475 = ssub.s32 128, 128
          %1476 = vsyncadd %s1453, %s1475
          %s1477 = sadd.s32 %s45, %s44
          %s1478 = smul.addr %s1477, 128
          %s1479 = scalar_lea.hbm %s12, %s1478
          %s1481 = sshll.u32 %s1456, 4
          %s1482 = int_to_ptr.vmem [resolvable:$true] %s1481
          %1484 = dma.vmem_to_hbm [thread:$0]  %s1482, 128, %s1479, %s1453
        $region120: #{tpu_custom_call.1} parent=63 // pred_fallthru
          _
      $region64: #{tpu_custom_call.1} parent=5 // pred_fallthru
        _
      %p1485 = scmp.le.s32.totalorder 2, %s35
      // Predicated region
      $region121: #{tpu_custom_call.1} parent=5 // pred_check
        %p1486 = pneg %p1485
      $region122: #{tpu_custom_call.1} parent=5 // pred_check_branch
        %1488 = sbr.rel (%p1486) target = $region124
      $region123: #{tpu_custom_call.1} parent=5 // pred_region
        %s1489 = ssub.s32 %s35, 2
        // Predicated region
        $region125: #{tpu_custom_call.1} parent=123 // pred_check
          %p1490 = pneg %p326
        $region126: #{tpu_custom_call.1} parent=123 // pred_check_branch
          %1492 = sbr.rel (%p1490) target = $region128
        $region127: #{tpu_custom_call.1} parent=123 // pred_region
          %s1493 = sand.u32 %s311, 1
          %s1494 = scalar_lea.sflag [#allocation8], %s1493
          %s1495 = sand.u32 %s311, 1
          %s1496 = smul.addr %s1495, 8
          %s1497 = scalar_lea.vmem [#allocation24], %s1496
          %1498 = dma.done %s1494, 128
        $region128: #{tpu_custom_call.1} parent=123 // pred_fallthru
          _
        // Predicated region
        $region129: #{tpu_custom_call.1} parent=123 // pred_check
          %p1499 = pneg %p354
        $region130: #{tpu_custom_call.1} parent=123 // pred_check_branch
          %1501 = sbr.rel (%p1499) target = $region132
        $region131: #{tpu_custom_call.1} parent=123 // pred_region
          %s1502 = sand.u32 %s339, 1
          %s1503 = scalar_lea.sflag [#allocation26], %s1502
          %s1504 = sand.u32 %s339, 1
          %s1505 = smul.addr %s1504, 8
          %s1506 = scalar_lea.vmem [#allocation25], %s1505
          %1507 = dma.done %s1503, 128
        $region132: #{tpu_custom_call.1} parent=123 // pred_fallthru
          _
      $region124: #{tpu_custom_call.1} parent=5 // pred_fallthru
        _
    $region6: #{tpu_custom_call.1} parent=1 // loop_footer
      %s39 = sadd.s32 1, %s35
    $region7: #{tpu_custom_call.1} parent=1 // loop_footer_branch
      %34 = sbr.rel target = $region3
    $region8: #{tpu_custom_call.1} parent=1 // loop_exit
      _
    %1508 = vsyncpa [#allocation7], 1
    %s1509 = scalar_lea.sflag [#allocation7], 1
    %1510 = vsyncpa %s1509, 1
    %1511 = vsyncpa [#allocation10], 1
    %s1512 = scalar_lea.sflag [#allocation10], 1
    %1513 = vsyncpa %s1512, 1
    %1514 = vsyncpa [#allocation13], 1
    %1515 = vsyncpa [#allocation16], 1
    %1516 = vsyncpa [#allocation19], 1
    %1517 = vsyncpa [#allocation22], 1
    %1518 = vsyncpa [#allocation8], 1
    %s1519 = scalar_lea.sflag [#allocation8], 1
    %1520 = vsyncpa %s1519, 1
    %1521 = vsyncpa [#allocation26], 1
    %s1522 = scalar_lea.sflag [#allocation26], 1
    %1523 = vsyncpa %s1522, 1

</llo_original>
